<compile_context>
chip_gen: v5e
topology: v5e:2x2
jax: 0.10.0
libtpu: 0.0.40
codegen_flags: <defaults>
</compile_context>

<pallas_src>
import math

import jax
import jax.numpy as jnp
from jax.experimental import pallas as pl
from jax.experimental.pallas import tpu as pltpu

# ----------------------------- config ---------------------------------------
B = 2          # batch
S = 8          # sequence length
H = 32         # hidden size
NH = 2         # attention heads
DH = H // NH   # head dim
I = 64         # intermediate (FFN) size
L = 2          # number of transformer layers
VOCAB = 100
TYPE_VOCAB = 2
MAX_POS = 32
LN_EPS = 1e-12
DR_RATE = None  # module's dr_rate; None => no dropout (identity)

ATTN_SCALE = 1.0 / math.sqrt(DH)


# ----------------------------- fused Pallas kernel ----------------------------
def _layernorm(x, gamma, beta):
    mean = jnp.mean(x, axis=-1, keepdims=True)
    xc = x - mean
    var = jnp.mean(xc * xc, axis=-1, keepdims=True)
    inv = jax.lax.rsqrt(var + LN_EPS)
    return xc * inv * gamma + beta


def _bert_fused_kernel(
    x_emb_ref, emb_g_ref, emb_b_ref, bias_ref,
    wqkv_ref, bqkv_ref, wo_ref, bo_ref, ln1_g_ref, ln1_b_ref,
    w1_ref, b1_ref, w2_ref, b2_ref, ln2_g_ref, ln2_b_ref,
    pool_w_ref, pool_b_ref,
    out_ref,
    x_scr,
):
    layer = pl.program_id(0)

    # Embedding layernorm once; result stays VMEM-resident for all layers.
    @pl.when(layer == 0)
    def _():
        x_scr[...] = _layernorm(x_emb_ref[...], emb_g_ref[...], emb_b_ref[...])

    x = x_scr[...]                                                  # (B*S, H) f32

    # ---------------- self-attention (fused QKV, all heads in-kernel) ----------
    qkv = jnp.dot(x, wqkv_ref[...], preferred_element_type=jnp.float32) + bqkv_ref[...]
    mask_bias = bias_ref[...]                                       # (B, 1, S), hoisted

    ctx_heads = []
    for h in range(NH):                                             # static unroll
        q_h = qkv[:, h * DH:(h + 1) * DH].reshape(B, S, DH)
        k_h = qkv[:, H + h * DH:H + (h + 1) * DH].reshape(B, S, DH)
        v_h = qkv[:, 2 * H + h * DH:2 * H + (h + 1) * DH].reshape(B, S, DH)
        s = jnp.einsum("bqd,bkd->bqk", q_h, k_h,
                       preferred_element_type=jnp.float32) * ATTN_SCALE
        s = s + mask_bias                                           # additive key mask
        m = jnp.max(s, axis=-1, keepdims=True)
        p = jnp.exp(s - m)
        denom = jnp.sum(p, axis=-1, keepdims=True)
        p = p * pl.reciprocal(denom, approx=True)
        ctx_h = jnp.einsum("bqk,bkd->bqd", p, v_h,
                           preferred_element_type=jnp.float32)
        ctx_heads.append(ctx_h.reshape(B * S, DH))
    ctx = jnp.concatenate(ctx_heads, axis=-1)                       # (B*S, H)

    attn_out = jnp.dot(ctx, wo_ref[...], preferred_element_type=jnp.float32) + bo_ref[...]
    x = _layernorm(x + attn_out, ln1_g_ref[...], ln1_b_ref[...])

    # ---------------- feed-forward ---------------------------------------------
    h1 = jnp.dot(x, w1_ref[...], preferred_element_type=jnp.float32) + b1_ref[...]
    h1 = jax.nn.gelu(h1, approximate=True)   # tanh approx (see notes)
    ffn = jnp.dot(h1, w2_ref[...], preferred_element_type=jnp.float32) + b2_ref[...]
    x = _layernorm(x + ffn, ln2_g_ref[...], ln2_b_ref[...])
    x_scr[...] = x

    # ---------------- pooler (last layer only) ---------------------------------
    @pl.when(layer == pl.num_programs(0) - 1)
    def _():
        first = jnp.concatenate([x[b * S:b * S + 1, :] for b in range(B)], axis=0)  # (B, H)
        pooled = jnp.dot(first, pool_w_ref[...], preferred_element_type=jnp.float32)
        out_ref[...] = jnp.tanh(pooled + pool_b_ref[...])


def bert_fused_forward(x_emb, mask_bias, p):
    """x_emb: (B*S, H); mask_bias: (B, 1, S); stacked params -> pooler (B, H)."""

    def full(shape):
        return pl.BlockSpec(shape, lambda l, _n=len(shape): (0,) * _n)

    def per_layer(shape):
        return pl.BlockSpec((None,) + shape,
                            lambda l, _n=len(shape): (l,) + (0,) * _n)

    in_specs = [
        full((B * S, H)),        # x_emb
        full((1, H)),            # emb_ln_g
        full((1, H)),            # emb_ln_b
        full((B, 1, S)),         # mask bias
        per_layer((H, 3 * H)),   # wqkv
        per_layer((1, 3 * H)),   # bqkv
        per_layer((H, H)),       # wo
        per_layer((1, H)),       # bo
        per_layer((1, H)),       # ln1_g
        per_layer((1, H)),       # ln1_b
        per_layer((H, I)),       # w1
        per_layer((1, I)),       # b1
        per_layer((I, H)),       # w2
        per_layer((1, H)),       # b2
        per_layer((1, H)),       # ln2_g
        per_layer((1, H)),       # ln2_b
        full((H, H)),            # pool_w
        full((1, H)),            # pool_b
    ]

    return pl.pallas_call(
        _bert_fused_kernel,
        out_shape=jax.ShapeDtypeStruct((B, H), jnp.float32),
        grid=(L,),
        in_specs=in_specs,
        out_specs=pl.BlockSpec((B, H), lambda l: (0, 0)),
        scratch_shapes=[pltpu.VMEM((B * S, H), jnp.float32)],
        compiler_params=pltpu.CompilerParams(
            dimension_semantics=("arbitrary",)),   # layers carry state -> sequential
    )(
        x_emb, p["emb_ln_g"], p["emb_ln_b"], mask_bias,
        p["wqkv"], p["bqkv"], p["wo"], p["bo"], p["ln1_g"], p["ln1_b"],
        p["w1"], p["b1"], p["w2"], p["b2"], p["ln2_g"], p["ln2_b"],
        p["pool_w"], p["pool_b"],
    )


# ----------------------------- parameter init --------------------------------
def init_params(key):
    def nrm(k, shape, std=0.02):
        return (std * jax.random.normal(k, shape)).astype(jnp.float32)

    keys = iter(jax.random.split(key, 8 + L * 8))
    p = {
        "word_emb": nrm(next(keys), (VOCAB, H)),
        "pos_emb": nrm(next(keys), (MAX_POS, H)),
        "type_emb": nrm(next(keys), (TYPE_VOCAB, H)),
        "emb_ln_g": jnp.ones((1, H), jnp.float32),
        "emb_ln_b": jnp.zeros((1, H), jnp.float32),
        "pool_w": nrm(next(keys), (H, H)),
        "pool_b": jnp.zeros((1, H), jnp.float32),
    }
    wqkv, wo, w1, w2 = [], [], [], []
    for _ in range(L):
        wq = nrm(next(keys), (H, H))
        wk = nrm(next(keys), (H, H))
        wv = nrm(next(keys), (H, H))
        wqkv.append(jnp.concatenate([wq, wk, wv], axis=1))   # fused QKV (H, 3H)
        wo.append(nrm(next(keys), (H, H)))
        w1.append(nrm(next(keys), (H, I)))
        w2.append(nrm(next(keys), (I, H)))
    p["wqkv"] = jnp.stack(wqkv)                              # (L, H, 3H)
    p["bqkv"] = jnp.zeros((L, 1, 3 * H), jnp.float32)
    p["wo"] = jnp.stack(wo)                                  # (L, H, H)
    p["bo"] = jnp.zeros((L, 1, H), jnp.float32)
    p["ln1_g"] = jnp.ones((L, 1, H), jnp.float32)
    p["ln1_b"] = jnp.zeros((L, 1, H), jnp.float32)
    p["w1"] = jnp.stack(w1)                                  # (L, H, I)
    p["b1"] = jnp.zeros((L, 1, I), jnp.float32)
    p["w2"] = jnp.stack(w2)                                  # (L, I, H)
    p["b2"] = jnp.zeros((L, 1, H), jnp.float32)
    p["ln2_g"] = jnp.ones((L, 1, H), jnp.float32)
    p["ln2_b"] = jnp.zeros((L, 1, H), jnp.float32)
    return p


# ----------------------------- BERT forward -----------------------------------
def bert_forward(params, token_ids, valid_length, segment_ids):
    # gen_attention_mask semantics: mask[i, :valid[i]] = 1 ; hoisted to plain JAX
    pos = jnp.arange(S, dtype=jnp.int32)
    attention_mask = (pos[None, :] < valid_length.astype(jnp.int32)[:, None]).astype(jnp.float32)
    mask_bias = ((1.0 - attention_mask) * (-10000.0)).reshape(B, 1, S)

    # embeddings (gathers are XLA glue; everything downstream is ONE fused Pallas kernel)
    positions = jnp.arange(S, dtype=jnp.int32)
    x = (params["word_emb"][token_ids]
         + params["pos_emb"][positions][None, :, :]
         + params["type_emb"][segment_ids.astype(jnp.int32)])       # (B, S, H)
    x = x.reshape(B * S, H).astype(jnp.float32)

    pooler = bert_fused_forward(x, mask_bias, params)               # (B, H)

    # module forward: optional dropout on pooler, else identity
    # TODO(synk): dropout (dr_rate) would need PRNG-based masking; dr_rate=None here.
    return pooler


# ----------------------------- main ------------------------------------------
if __name__ == "__main__":
    key = jax.random.PRNGKey(0)
    kp, kt, ks = jax.random.split(key, 3)

    params = init_params(kp)
    token_ids = jax.random.randint(kt, (B, S), 0, VOCAB, dtype=jnp.int32)
    segment_ids = jax.random.randint(ks, (B, S), 0, TYPE_VOCAB, dtype=jnp.int32)
    valid_length = jnp.array([5, 8], dtype=jnp.int32)

    out = bert_forward(params, token_ids, valid_length, segment_ids)
    out = jax.block_until_ready(out)
    assert out.shape == (B, H) and out.dtype == jnp.float32
    print("KERNEL_OK")
</pallas_src>

<mosaic_0001>
module attributes {stable_mosaic.version = 11 : i64} {
  func.func @_bert_fused_kernel(%arg0: i32, %arg1: memref<16x32xf32, #tpu.memory_space<vmem>>, %arg2: memref<1x32xf32, #tpu.memory_space<vmem>>, %arg3: memref<1x32xf32, #tpu.memory_space<vmem>>, %arg4: memref<2x1x8xf32, #tpu.memory_space<vmem>>, %arg5: memref<1x32x96xf32, #tpu.memory_space<vmem>>, %arg6: memref<1x1x96xf32, #tpu.memory_space<vmem>>, %arg7: memref<1x32x32xf32, #tpu.memory_space<vmem>>, %arg8: memref<1x1x32xf32, #tpu.memory_space<vmem>>, %arg9: memref<1x1x32xf32, #tpu.memory_space<vmem>>, %arg10: memref<1x1x32xf32, #tpu.memory_space<vmem>>, %arg11: memref<1x32x64xf32, #tpu.memory_space<vmem>>, %arg12: memref<1x1x64xf32, #tpu.memory_space<vmem>>, %arg13: memref<1x64x32xf32, #tpu.memory_space<vmem>>, %arg14: memref<1x1x32xf32, #tpu.memory_space<vmem>>, %arg15: memref<1x1x32xf32, #tpu.memory_space<vmem>>, %arg16: memref<1x1x32xf32, #tpu.memory_space<vmem>>, %arg17: memref<32x32xf32, #tpu.memory_space<vmem>>, %arg18: memref<1x32xf32, #tpu.memory_space<vmem>>, %arg19: memref<2x32xf32, #tpu.memory_space<vmem>>, %arg20: memref<16x32xf32, #tpu.memory_space<vmem>>) attributes {dimension_semantics = [#tpu.dimension_semantics<arbitrary>], iteration_bounds = array<i64: 2>, scalar_prefetch = 0 : i64, scratch_operands = 1 : i64, tpu.core_type = #tpu.core_type<tc>, window_params = [{pipeline_mode = #tpu.pipeline_mode<synchronous>, transform_indices = @transform_0, window_bounds = array<i64: 16, 32>}, {pipeline_mode = #tpu.pipeline_mode<synchronous>, transform_indices = @transform_1, window_bounds = array<i64: 1, 32>}, {pipeline_mode = #tpu.pipeline_mode<synchronous>, transform_indices = @transform_2, window_bounds = array<i64: 1, 32>}, {pipeline_mode = #tpu.pipeline_mode<synchronous>, transform_indices = @transform_3, window_bounds = array<i64: 2, 1, 8>}, {transform_indices = @transform_4, window_bounds = array<i64: 1, 32, 96>}, {transform_indices = @transform_5, window_bounds = array<i64: 1, 1, 96>}, {transform_indices = @transform_6, window_bounds = array<i64: 1, 32, 32>}, {transform_indices = @transform_7, window_bounds = array<i64: 1, 1, 32>}, {transform_indices = @transform_8, window_bounds = array<i64: 1, 1, 32>}, {transform_indices = @transform_9, window_bounds = array<i64: 1, 1, 32>}, {transform_indices = @transform_10, window_bounds = array<i64: 1, 32, 64>}, {transform_indices = @transform_11, window_bounds = array<i64: 1, 1, 64>}, {transform_indices = @transform_12, window_bounds = array<i64: 1, 64, 32>}, {transform_indices = @transform_13, window_bounds = array<i64: 1, 1, 32>}, {transform_indices = @transform_14, window_bounds = array<i64: 1, 1, 32>}, {transform_indices = @transform_15, window_bounds = array<i64: 1, 1, 32>}, {pipeline_mode = #tpu.pipeline_mode<synchronous>, transform_indices = @transform_16, window_bounds = array<i64: 32, 32>}, {pipeline_mode = #tpu.pipeline_mode<synchronous>, transform_indices = @transform_17, window_bounds = array<i64: 1, 32>}, {pipeline_mode = #tpu.pipeline_mode<synchronous>, transform_indices = @transform_18, window_bounds = array<i64: 2, 32>}]} {
    %c0_i32 = arith.constant 0 : i32
    %0 = arith.cmpi eq, %arg0, %c0_i32 : i32
    %1 = arith.extui %0 : i1 to i32
    %c0_i32_0 = arith.constant 0 : i32
    %2 = arith.cmpi ne, %1, %c0_i32_0 : i32
    scf.if %2 {
      %c0_71 = arith.constant 0 : index
      %c0_72 = arith.constant 0 : index
      %147 = vector.load %arg1[%c0_71, %c0_72] : memref<16x32xf32, #tpu.memory_space<vmem>>, vector<16x32xf32>
      %c0_73 = arith.constant 0 : index
      %c0_74 = arith.constant 0 : index
      %148 = vector.load %arg2[%c0_73, %c0_74] : memref<1x32xf32, #tpu.memory_space<vmem>>, vector<1x32xf32>
      %c0_75 = arith.constant 0 : index
      %c0_76 = arith.constant 0 : index
      %149 = vector.load %arg3[%c0_75, %c0_76] : memref<1x32xf32, #tpu.memory_space<vmem>>, vector<1x32xf32>
      %cst_77 = arith.constant dense<0.000000e+00> : vector<16xf32>
      %150 = vector.multi_reduction <add>, %147, %cst_77 [1] : vector<16x32xf32> to vector<16xf32>
      %151 = vector.shape_cast %150 : vector<16xf32> to vector<16x1xf32>
      %cst_78 = arith.constant 3.200000e+01 : f32
      %152 = vector.broadcast %cst_78 : f32 to vector<16x1xf32>
      %153 = arith.divf %151, %152 : vector<16x1xf32>
      %154 = vector.broadcast %153 : vector<16x1xf32> to vector<16x32xf32>
      %155 = arith.subf %147, %154 : vector<16x32xf32>
      %156 = arith.mulf %155, %155 : vector<16x32xf32>
      %cst_79 = arith.constant dense<0.000000e+00> : vector<16xf32>
      %157 = vector.multi_reduction <add>, %156, %cst_79 [1] : vector<16x32xf32> to vector<16xf32>
      %158 = vector.shape_cast %157 : vector<16xf32> to vector<16x1xf32>
      %cst_80 = arith.constant 3.200000e+01 : f32
      %159 = vector.broadcast %cst_80 : f32 to vector<16x1xf32>
      %160 = arith.divf %158, %159 : vector<16x1xf32>
      %cst_81 = arith.constant 9.99999996E-13 : f32
      %161 = vector.broadcast %cst_81 : f32 to vector<16x1xf32>
      %162 = arith.addf %160, %161 : vector<16x1xf32>
      %163 = math.rsqrt %162 : vector<16x1xf32>
      %164 = vector.broadcast %163 : vector<16x1xf32> to vector<16x32xf32>
      %165 = arith.mulf %155, %164 : vector<16x32xf32>
      %166 = vector.broadcast %148 : vector<1x32xf32> to vector<16x32xf32>
      %167 = arith.mulf %165, %166 : vector<16x32xf32>
      %168 = vector.broadcast %149 : vector<1x32xf32> to vector<16x32xf32>
      %169 = arith.addf %167, %168 : vector<16x32xf32>
      %c0_82 = arith.constant 0 : index
      %c0_83 = arith.constant 0 : index
      %170 = vector.load %arg20[%c0_82, %c0_83] : memref<16x32xf32, #tpu.memory_space<vmem>>, vector<16x32xf32>
      tpu.vector_store %arg20[%c0_82, %c0_83], %169 {strides = array<i32>} : memref<16x32xf32, #tpu.memory_space<vmem>>, vector<16x32xf32>,
    } else {
    }
    %c0 = arith.constant 0 : index
    %c0_1 = arith.constant 0 : index
    %3 = vector.load %arg20[%c0, %c0_1] : memref<16x32xf32, #tpu.memory_space<vmem>>, vector<16x32xf32>
    %c0_2 = arith.constant 0 : index
    %c0_3 = arith.constant 0 : index
    %c0_4 = arith.constant 0 : index
    %4 = vector.load %arg5[%c0_2, %c0_3, %c0_4] : memref<1x32x96xf32, #tpu.memory_space<vmem>>, vector<1x32x96xf32>
    %5 = vector.shape_cast %4 : vector<1x32x96xf32> to vector<32x96xf32>
    %cst = arith.constant dense<0.000000e+00> : vector<16x96xf32>
    %6 = tpu.matmul %3, %5, %cst {dimension_numbers = #tpu.dot_dimension_numbers<[1], [0], [0], [1], [0, 0, 1, 1], [], []>} : vector<16x32xf32>, vector<32x96xf32>, vector<16x96xf32> -> vector<16x96xf32>
    %c0_5 = arith.constant 0 : index
    %c0_6 = arith.constant 0 : index
    %c0_7 = arith.constant 0 : index
    %7 = vector.load %arg6[%c0_5, %c0_6, %c0_7] : memref<1x1x96xf32, #tpu.memory_space<vmem>>, vector<1x1x96xf32>
    %8 = vector.shape_cast %7 : vector<1x1x96xf32> to vector<1x96xf32>
    %9 = vector.broadcast %8 : vector<1x96xf32> to vector<16x96xf32>
    %10 = arith.addf %6, %9 : vector<16x96xf32>
    %c0_8 = arith.constant 0 : index
    %c0_9 = arith.constant 0 : index
    %c0_10 = arith.constant 0 : index
    %11 = vector.load %arg4[%c0_8, %c0_9, %c0_10] : memref<2x1x8xf32, #tpu.memory_space<vmem>>, vector<2x1x8xf32>
    %12 = vector.extract_strided_slice %10 {offsets = [0, 0], sizes = [16, 16], strides = [1, 1]} : vector<16x96xf32> to vector<16x16xf32>
    %13 = vector.shape_cast %12 : vector<16x16xf32> to vector<2x8x16xf32>
    %14 = vector.extract_strided_slice %10 {offsets = [0, 32], sizes = [16, 16], strides = [1, 1]} : vector<16x96xf32> to vector<16x16xf32>
    %15 = vector.shape_cast %14 : vector<16x16xf32> to vector<2x8x16xf32>
    %16 = vector.extract_strided_slice %10 {offsets = [0, 64], sizes = [16, 16], strides = [1, 1]} : vector<16x96xf32> to vector<16x16xf32>
    %17 = vector.shape_cast %16 : vector<16x16xf32> to vector<2x8x16xf32>
    "tpu.trace_start"() <{level = 10 : i32, message = "bqd,bkd->bqk"}> : () -> ()
    %cst_11 = arith.constant dense<0.000000e+00> : vector<2x8x8xf32>
    %18 = tpu.matmul %13, %15, %cst_11 {dimension_numbers = #tpu.dot_dimension_numbers<[2], [2], [1], [1], [0, 0, 0, 1, 1, 1], [0], [0]>} : vector<2x8x16xf32>, vector<2x8x16xf32>, vector<2x8x8xf32> -> vector<2x8x8xf32>
    "tpu.trace_stop"() : () -> ()
    %cst_12 = arith.constant 2.500000e-01 : f32
    %19 = vector.broadcast %cst_12 : f32 to vector<2x8x8xf32>
    %20 = arith.mulf %18, %19 : vector<2x8x8xf32>
    %21 = vector.broadcast %11 : vector<2x1x8xf32> to vector<2x8x8xf32>
    %22 = arith.addf %20, %21 : vector<2x8x8xf32>
    %cst_13 = arith.constant dense<0xFF800000> : vector<2x8xf32>
    %23 = vector.multi_reduction <maximumf>, %22, %cst_13 [2] : vector<2x8x8xf32> to vector<2x8xf32>
    %24 = vector.shape_cast %23 : vector<2x8xf32> to vector<2x8x1xf32>
    %25 = vector.broadcast %24 : vector<2x8x1xf32> to vector<2x8x8xf32>
    %26 = arith.subf %22, %25 : vector<2x8x8xf32>
    %27 = math.exp %26 : vector<2x8x8xf32>
    %cst_14 = arith.constant dense<0.000000e+00> : vector<2x8xf32>
    %28 = vector.multi_reduction <add>, %27, %cst_14 [2] : vector<2x8x8xf32> to vector<2x8xf32>
    %29 = vector.shape_cast %28 : vector<2x8xf32> to vector<2x8x1xf32>
    %30 = tpu.reciprocal %29 {approx = true} : vector<2x8x1xf32> -> vector<2x8x1xf32>
    %31 = vector.broadcast %30 : vector<2x8x1xf32> to vector<2x8x8xf32>
    %32 = arith.mulf %27, %31 : vector<2x8x8xf32>
    "tpu.trace_start"() <{level = 10 : i32, message = "bqk,bkd->bqd"}> : () -> ()
    %cst_15 = arith.constant dense<0.000000e+00> : vector<2x8x16xf32>
    %33 = tpu.matmul %32, %17, %cst_15 {dimension_numbers = #tpu.dot_dimension_numbers<[2], [1], [1], [2], [0, 0, 0, 1, 1, 2], [0], [0]>} : vector<2x8x8xf32>, vector<2x8x16xf32>, vector<2x8x16xf32> -> vector<2x8x16xf32>
    "tpu.trace_stop"() : () -> ()
    %34 = vector.shape_cast %33 : vector<2x8x16xf32> to vector<16x16xf32>
    %35 = vector.extract_strided_slice %10 {offsets = [0, 16], sizes = [16, 16], strides = [1, 1]} : vector<16x96xf32> to vector<16x16xf32>
    %36 = vector.shape_cast %35 : vector<16x16xf32> to vector<2x8x16xf32>
    %37 = vector.extract_strided_slice %10 {offsets = [0, 48], sizes = [16, 16], strides = [1, 1]} : vector<16x96xf32> to vector<16x16xf32>
    %38 = vector.shape_cast %37 : vector<16x16xf32> to vector<2x8x16xf32>
    %39 = vector.extract_strided_slice %10 {offsets = [0, 80], sizes = [16, 16], strides = [1, 1]} : vector<16x96xf32> to vector<16x16xf32>
    %40 = vector.shape_cast %39 : vector<16x16xf32> to vector<2x8x16xf32>
    "tpu.trace_start"() <{level = 10 : i32, message = "bqd,bkd->bqk"}> : () -> ()
    %cst_16 = arith.constant dense<0.000000e+00> : vector<2x8x8xf32>
    %41 = tpu.matmul %36, %38, %cst_16 {dimension_numbers = #tpu.dot_dimension_numbers<[2], [2], [1], [1], [0, 0, 0, 1, 1, 1], [0], [0]>} : vector<2x8x16xf32>, vector<2x8x16xf32>, vector<2x8x8xf32> -> vector<2x8x8xf32>
    "tpu.trace_stop"() : () -> ()
    %cst_17 = arith.constant 2.500000e-01 : f32
    %42 = vector.broadcast %cst_17 : f32 to vector<2x8x8xf32>
    %43 = arith.mulf %41, %42 : vector<2x8x8xf32>
    %44 = vector.broadcast %11 : vector<2x1x8xf32> to vector<2x8x8xf32>
    %45 = arith.addf %43, %44 : vector<2x8x8xf32>
    %cst_18 = arith.constant dense<0xFF800000> : vector<2x8xf32>
    %46 = vector.multi_reduction <maximumf>, %45, %cst_18 [2] : vector<2x8x8xf32> to vector<2x8xf32>
    %47 = vector.shape_cast %46 : vector<2x8xf32> to vector<2x8x1xf32>
    %48 = vector.broadcast %47 : vector<2x8x1xf32> to vector<2x8x8xf32>
    %49 = arith.subf %45, %48 : vector<2x8x8xf32>
    %50 = math.exp %49 : vector<2x8x8xf32>
    %cst_19 = arith.constant dense<0.000000e+00> : vector<2x8xf32>
    %51 = vector.multi_reduction <add>, %50, %cst_19 [2] : vector<2x8x8xf32> to vector<2x8xf32>
    %52 = vector.shape_cast %51 : vector<2x8xf32> to vector<2x8x1xf32>
    %53 = tpu.reciprocal %52 {approx = true} : vector<2x8x1xf32> -> vector<2x8x1xf32>
    %54 = vector.broadcast %53 : vector<2x8x1xf32> to vector<2x8x8xf32>
    %55 = arith.mulf %50, %54 : vector<2x8x8xf32>
    "tpu.trace_start"() <{level = 10 : i32, message = "bqk,bkd->bqd"}> : () -> ()
    %cst_20 = arith.constant dense<0.000000e+00> : vector<2x8x16xf32>
    %56 = tpu.matmul %55, %40, %cst_20 {dimension_numbers = #tpu.dot_dimension_numbers<[2], [1], [1], [2], [0, 0, 0, 1, 1, 2], [0], [0]>} : vector<2x8x8xf32>, vector<2x8x16xf32>, vector<2x8x16xf32> -> vector<2x8x16xf32>
    "tpu.trace_stop"() : () -> ()
    %57 = vector.shape_cast %56 : vector<2x8x16xf32> to vector<16x16xf32>
    %58 = tpu.concatenate %34, %57 in 1 : vector<16x16xf32>, vector<16x16xf32> -> vector<16x32xf32>
    %c0_21 = arith.constant 0 : index
    %c0_22 = arith.constant 0 : index
    %c0_23 = arith.constant 0 : index
    %59 = vector.load %arg7[%c0_21, %c0_22, %c0_23] : memref<1x32x32xf32, #tpu.memory_space<vmem>>, vector<1x32x32xf32>
    %60 = vector.shape_cast %59 : vector<1x32x32xf32> to vector<32x32xf32>
    %cst_24 = arith.constant dense<0.000000e+00> : vector<16x32xf32>
    %61 = tpu.matmul %58, %60, %cst_24 {dimension_numbers = #tpu.dot_dimension_numbers<[1], [0], [0], [1], [0, 0, 1, 1], [], []>} : vector<16x32xf32>, vector<32x32xf32>, vector<16x32xf32> -> vector<16x32xf32>
    %c0_25 = arith.constant 0 : index
    %c0_26 = arith.constant 0 : index
    %c0_27 = arith.constant 0 : index
    %62 = vector.load %arg8[%c0_25, %c0_26, %c0_27] : memref<1x1x32xf32, #tpu.memory_space<vmem>>, vector<1x1x32xf32>
    %63 = vector.shape_cast %62 : vector<1x1x32xf32> to vector<1x32xf32>
    %64 = vector.broadcast %63 : vector<1x32xf32> to vector<16x32xf32>
    %65 = arith.addf %61, %64 : vector<16x32xf32>
    %66 = arith.addf %3, %65 : vector<16x32xf32>
    %c0_28 = arith.constant 0 : index
    %c0_29 = arith.constant 0 : index
    %c0_30 = arith.constant 0 : index
    %67 = vector.load %arg9[%c0_28, %c0_29, %c0_30] : memref<1x1x32xf32, #tpu.memory_space<vmem>>, vector<1x1x32xf32>
    %68 = vector.shape_cast %67 : vector<1x1x32xf32> to vector<1x32xf32>
    %c0_31 = arith.constant 0 : index
    %c0_32 = arith.constant 0 : index
    %c0_33 = arith.constant 0 : index
    %69 = vector.load %arg10[%c0_31, %c0_32, %c0_33] : memref<1x1x32xf32, #tpu.memory_space<vmem>>, vector<1x1x32xf32>
    %70 = vector.shape_cast %69 : vector<1x1x32xf32> to vector<1x32xf32>
    %cst_34 = arith.constant dense<0.000000e+00> : vector<16xf32>
    %71 = vector.multi_reduction <add>, %66, %cst_34 [1] : vector<16x32xf32> to vector<16xf32>
    %72 = vector.shape_cast %71 : vector<16xf32> to vector<16x1xf32>
    %cst_35 = arith.constant 3.200000e+01 : f32
    %73 = vector.broadcast %cst_35 : f32 to vector<16x1xf32>
    %74 = arith.divf %72, %73 : vector<16x1xf32>
    %75 = vector.broadcast %74 : vector<16x1xf32> to vector<16x32xf32>
    %76 = arith.subf %66, %75 : vector<16x32xf32>
    %77 = arith.mulf %76, %76 : vector<16x32xf32>
    %cst_36 = arith.constant dense<0.000000e+00> : vector<16xf32>
    %78 = vector.multi_reduction <add>, %77, %cst_36 [1] : vector<16x32xf32> to vector<16xf32>
    %79 = vector.shape_cast %78 : vector<16xf32> to vector<16x1xf32>
    %cst_37 = arith.constant 3.200000e+01 : f32
    %80 = vector.broadcast %cst_37 : f32 to vector<16x1xf32>
    %81 = arith.divf %79, %80 : vector<16x1xf32>
    %cst_38 = arith.constant 9.99999996E-13 : f32
    %82 = vector.broadcast %cst_38 : f32 to vector<16x1xf32>
    %83 = arith.addf %81, %82 : vector<16x1xf32>
    %84 = math.rsqrt %83 : vector<16x1xf32>
    %85 = vector.broadcast %84 : vector<16x1xf32> to vector<16x32xf32>
    %86 = arith.mulf %76, %85 : vector<16x32xf32>
    %87 = vector.broadcast %68 : vector<1x32xf32> to vector<16x32xf32>
    %88 = arith.mulf %86, %87 : vector<16x32xf32>
    %89 = vector.broadcast %70 : vector<1x32xf32> to vector<16x32xf32>
    %90 = arith.addf %88, %89 : vector<16x32xf32>
    %c0_39 = arith.constant 0 : index
    %c0_40 = arith.constant 0 : index
    %c0_41 = arith.constant 0 : index
    %91 = vector.load %arg11[%c0_39, %c0_40, %c0_41] : memref<1x32x64xf32, #tpu.memory_space<vmem>>, vector<1x32x64xf32>
    %92 = vector.shape_cast %91 : vector<1x32x64xf32> to vector<32x64xf32>
    %cst_42 = arith.constant dense<0.000000e+00> : vector<16x64xf32>
    %93 = tpu.matmul %90, %92, %cst_42 {dimension_numbers = #tpu.dot_dimension_numbers<[1], [0], [0], [1], [0, 0, 1, 1], [], []>} : vector<16x32xf32>, vector<32x64xf32>, vector<16x64xf32> -> vector<16x64xf32>
    %c0_43 = arith.constant 0 : index
    %c0_44 = arith.constant 0 : index
    %c0_45 = arith.constant 0 : index
    %94 = vector.load %arg12[%c0_43, %c0_44, %c0_45] : memref<1x1x64xf32, #tpu.memory_space<vmem>>, vector<1x1x64xf32>
    %95 = vector.shape_cast %94 : vector<1x1x64xf32> to vector<1x64xf32>
    %96 = vector.broadcast %95 : vector<1x64xf32> to vector<16x64xf32>
    %97 = arith.addf %93, %96 : vector<16x64xf32>
    %98 = arith.mulf %97, %97 : vector<16x64xf32>
    %99 = arith.mulf %97, %98 : vector<16x64xf32>
    %cst_46 = arith.constant 4.471500e-02 : f32
    %100 = vector.broadcast %cst_46 : f32 to vector<16x64xf32>
    %101 = arith.mulf %100, %99 : vector<16x64xf32>
    %102 = arith.addf %97, %101 : vector<16x64xf32>
    %cst_47 = arith.constant 0.797884583 : f32
    %103 = vector.broadcast %cst_47 : f32 to vector<16x64xf32>
    %104 = arith.mulf %103, %102 : vector<16x64xf32>
    %105 = math.tanh %104 : vector<16x64xf32>
    %cst_48 = arith.constant 1.000000e+00 : f32
    %106 = vector.broadcast %cst_48 : f32 to vector<16x64xf32>
    %107 = arith.addf %106, %105 : vector<16x64xf32>
    %cst_49 = arith.constant 5.000000e-01 : f32
    %108 = vector.broadcast %cst_49 : f32 to vector<16x64xf32>
    %109 = arith.mulf %108, %107 : vector<16x64xf32>
    %110 = arith.mulf %97, %109 : vector<16x64xf32>
    %c0_50 = arith.constant 0 : index
    %c0_51 = arith.constant 0 : index
    %c0_52 = arith.constant 0 : index
    %111 = vector.load %arg13[%c0_50, %c0_51, %c0_52] : memref<1x64x32xf32, #tpu.memory_space<vmem>>, vector<1x64x32xf32>
    %112 = vector.shape_cast %111 : vector<1x64x32xf32> to vector<64x32xf32>
    %cst_53 = arith.constant dense<0.000000e+00> : vector<16x32xf32>
    %113 = tpu.matmul %110, %112, %cst_53 {dimension_numbers = #tpu.dot_dimension_numbers<[1], [0], [0], [1], [0, 0, 1, 1], [], []>} : vector<16x64xf32>, vector<64x32xf32>, vector<16x32xf32> -> vector<16x32xf32>
    %c0_54 = arith.constant 0 : index
    %c0_55 = arith.constant 0 : index
    %c0_56 = arith.constant 0 : index
    %114 = vector.load %arg14[%c0_54, %c0_55, %c0_56] : memref<1x1x32xf32, #tpu.memory_space<vmem>>, vector<1x1x32xf32>
    %115 = vector.shape_cast %114 : vector<1x1x32xf32> to vector<1x32xf32>
    %116 = vector.broadcast %115 : vector<1x32xf32> to vector<16x32xf32>
    %117 = arith.addf %113, %116 : vector<16x32xf32>
    %118 = arith.addf %90, %117 : vector<16x32xf32>
    %c0_57 = arith.constant 0 : index
    %c0_58 = arith.constant 0 : index
    %c0_59 = arith.constant 0 : index
    %119 = vector.load %arg15[%c0_57, %c0_58, %c0_59] : memref<1x1x32xf32, #tpu.memory_space<vmem>>, vector<1x1x32xf32>
    %120 = vector.shape_cast %119 : vector<1x1x32xf32> to vector<1x32xf32>
    %c0_60 = arith.constant 0 : index
    %c0_61 = arith.constant 0 : index
    %c0_62 = arith.constant 0 : index
    %121 = vector.load %arg16[%c0_60, %c0_61, %c0_62] : memref<1x1x32xf32, #tpu.memory_space<vmem>>, vector<1x1x32xf32>
    %122 = vector.shape_cast %121 : vector<1x1x32xf32> to vector<1x32xf32>
    %cst_63 = arith.constant dense<0.000000e+00> : vector<16xf32>
    %123 = vector.multi_reduction <add>, %118, %cst_63 [1] : vector<16x32xf32> to vector<16xf32>
    %124 = vector.shape_cast %123 : vector<16xf32> to vector<16x1xf32>
    %cst_64 = arith.constant 3.200000e+01 : f32
    %125 = vector.broadcast %cst_64 : f32 to vector<16x1xf32>
    %126 = arith.divf %124, %125 : vector<16x1xf32>
    %127 = vector.broadcast %126 : vector<16x1xf32> to vector<16x32xf32>
    %128 = arith.subf %118, %127 : vector<16x32xf32>
    %129 = arith.mulf %128, %128 : vector<16x32xf32>
    %cst_65 = arith.constant dense<0.000000e+00> : vector<16xf32>
    %130 = vector.multi_reduction <add>, %129, %cst_65 [1] : vector<16x32xf32> to vector<16xf32>
    %131 = vector.shape_cast %130 : vector<16xf32> to vector<16x1xf32>
    %cst_66 = arith.constant 3.200000e+01 : f32
    %132 = vector.broadcast %cst_66 : f32 to vector<16x1xf32>
    %133 = arith.divf %131, %132 : vector<16x1xf32>
    %cst_67 = arith.constant 9.99999996E-13 : f32
    %134 = vector.broadcast %cst_67 : f32 to vector<16x1xf32>
    %135 = arith.addf %133, %134 : vector<16x1xf32>
    %136 = math.rsqrt %135 : vector<16x1xf32>
    %137 = vector.broadcast %136 : vector<16x1xf32> to vector<16x32xf32>
    %138 = arith.mulf %128, %137 : vector<16x32xf32>
    %139 = vector.broadcast %120 : vector<1x32xf32> to vector<16x32xf32>
    %140 = arith.mulf %138, %139 : vector<16x32xf32>
    %141 = vector.broadcast %122 : vector<1x32xf32> to vector<16x32xf32>
    %142 = arith.addf %140, %141 : vector<16x32xf32>
    %c0_68 = arith.constant 0 : index
    %c0_69 = arith.constant 0 : index
    %143 = vector.load %arg20[%c0_68, %c0_69] : memref<16x32xf32, #tpu.memory_space<vmem>>, vector<16x32xf32>
    tpu.vector_store %arg20[%c0_68, %c0_69], %142 {strides = array<i32>} : memref<16x32xf32, #tpu.memory_space<vmem>>, vector<16x32xf32>,
    %c1_i32 = arith.constant 1 : i32
    %144 = arith.cmpi eq, %arg0, %c1_i32 : i32
    %145 = arith.extui %144 : i1 to i32
    %c0_i32_70 = arith.constant 0 : i32
    %146 = arith.cmpi ne, %145, %c0_i32_70 : i32
    scf.if %146 {
      %147 = vector.extract_strided_slice %142 {offsets = [0, 0], sizes = [1, 32], strides = [1, 1]} : vector<16x32xf32> to vector<1x32xf32>
      %148 = vector.extract_strided_slice %142 {offsets = [8, 0], sizes = [1, 32], strides = [1, 1]} : vector<16x32xf32> to vector<1x32xf32>
      %149 = tpu.concatenate %147, %148 in 0 : vector<1x32xf32>, vector<1x32xf32> -> vector<2x32xf32>
      %c0_71 = arith.constant 0 : index
      %c0_72 = arith.constant 0 : index
      %150 = vector.load %arg17[%c0_71, %c0_72] : memref<32x32xf32, #tpu.memory_space<vmem>>, vector<32x32xf32>
      %cst_73 = arith.constant dense<0.000000e+00> : vector<2x32xf32>
      %151 = tpu.matmul %149, %150, %cst_73 {dimension_numbers = #tpu.dot_dimension_numbers<[1], [0], [0], [1], [0, 0, 1, 1], [], []>} : vector<2x32xf32>, vector<32x32xf32>, vector<2x32xf32> -> vector<2x32xf32>
      %c0_74 = arith.constant 0 : index
      %c0_75 = arith.constant 0 : index
      %152 = vector.load %arg18[%c0_74, %c0_75] : memref<1x32xf32, #tpu.memory_space<vmem>>, vector<1x32xf32>
      %153 = vector.broadcast %152 : vector<1x32xf32> to vector<2x32xf32>
      %154 = arith.addf %151, %153 : vector<2x32xf32>
      %155 = math.tanh %154 : vector<2x32xf32>
      %c0_76 = arith.constant 0 : index
      %c0_77 = arith.constant 0 : index
      %156 = vector.load %arg19[%c0_76, %c0_77] : memref<2x32xf32, #tpu.memory_space<vmem>>, vector<2x32xf32>
      tpu.vector_store %arg19[%c0_76, %c0_77], %155 {strides = array<i32>} : memref<2x32xf32, #tpu.memory_space<vmem>>, vector<2x32xf32>,
    } else {
    }
    return
  }
  func.func @transform_0(%arg0: i32) -> (i32, i32) {
    %c0_i32 = arith.constant 0 : i32
    %c0_i32_0 = arith.constant 0 : i32
    %c0_i32_1 = arith.constant 0 : i32
    return %c0_i32, %c0_i32_0 : i32, i32
  }
  func.func @transform_1(%arg0: i32) -> (i32, i32) {
    %c0_i32 = arith.constant 0 : i32
    %c0_i32_0 = arith.constant 0 : i32
    %c0_i32_1 = arith.constant 0 : i32
    return %c0_i32, %c0_i32_0 : i32, i32
  }
  func.func @transform_2(%arg0: i32) -> (i32, i32) {
    %c0_i32 = arith.constant 0 : i32
    %c0_i32_0 = arith.constant 0 : i32
    %c0_i32_1 = arith.constant 0 : i32
    return %c0_i32, %c0_i32_0 : i32, i32
  }
  func.func @transform_3(%arg0: i32) -> (i32, i32, i32) {
    %c0_i32 = arith.constant 0 : i32
    %c0_i32_0 = arith.constant 0 : i32
    %c0_i32_1 = arith.constant 0 : i32
    %c0_i32_2 = arith.constant 0 : i32
    return %c0_i32, %c0_i32_0, %c0_i32_1 : i32, i32, i32
  }
  func.func @transform_4(%arg0: i32) -> (i32, i32, i32) {
    %c0_i32 = arith.constant 0 : i32
    %c0_i32_0 = arith.constant 0 : i32
    %c0_i32_1 = arith.constant 0 : i32
    return %arg0, %c0_i32, %c0_i32_0 : i32, i32, i32
  }
  func.func @transform_5(%arg0: i32) -> (i32, i32, i32) {
    %c0_i32 = arith.constant 0 : i32
    %c0_i32_0 = arith.constant 0 : i32
    %c0_i32_1 = arith.constant 0 : i32
    return %arg0, %c0_i32, %c0_i32_0 : i32, i32, i32
  }
  func.func @transform_6(%arg0: i32) -> (i32, i32, i32) {
    %c0_i32 = arith.constant 0 : i32
    %c0_i32_0 = arith.constant 0 : i32
    %c0_i32_1 = arith.constant 0 : i32
    return %arg0, %c0_i32, %c0_i32_0 : i32, i32, i32
  }
  func.func @transform_7(%arg0: i32) -> (i32, i32, i32) {
    %c0_i32 = arith.constant 0 : i32
    %c0_i32_0 = arith.constant 0 : i32
    %c0_i32_1 = arith.constant 0 : i32
    return %arg0, %c0_i32, %c0_i32_0 : i32, i32, i32
  }
  func.func @transform_8(%arg0: i32) -> (i32, i32, i32) {
    %c0_i32 = arith.constant 0 : i32
    %c0_i32_0 = arith.constant 0 : i32
    %c0_i32_1 = arith.constant 0 : i32
    return %arg0, %c0_i32, %c0_i32_0 : i32, i32, i32
  }
  func.func @transform_9(%arg0: i32) -> (i32, i32, i32) {
    %c0_i32 = arith.constant 0 : i32
    %c0_i32_0 = arith.constant 0 : i32
    %c0_i32_1 = arith.constant 0 : i32
    return %arg0, %c0_i32, %c0_i32_0 : i32, i32, i32
  }
  func.func @transform_10(%arg0: i32) -> (i32, i32, i32) {
    %c0_i32 = arith.constant 0 : i32
    %c0_i32_0 = arith.constant 0 : i32
    %c0_i32_1 = arith.constant 0 : i32
    return %arg0, %c0_i32, %c0_i32_0 : i32, i32, i32
  }
  func.func @transform_11(%arg0: i32) -> (i32, i32, i32) {
    %c0_i32 = arith.constant 0 : i32
    %c0_i32_0 = arith.constant 0 : i32
    %c0_i32_1 = arith.constant 0 : i32
    return %arg0, %c0_i32, %c0_i32_0 : i32, i32, i32
  }
  func.func @transform_12(%arg0: i32) -> (i32, i32, i32) {
    %c0_i32 = arith.constant 0 : i32
    %c0_i32_0 = arith.constant 0 : i32
    %c0_i32_1 = arith.constant 0 : i32
    return %arg0, %c0_i32, %c0_i32_0 : i32, i32, i32
  }
  func.func @transform_13(%arg0: i32) -> (i32, i32, i32) {
    %c0_i32 = arith.constant 0 : i32
    %c0_i32_0 = arith.constant 0 : i32
    %c0_i32_1 = arith.constant 0 : i32
    return %arg0, %c0_i32, %c0_i32_0 : i32, i32, i32
  }
  func.func @transform_14(%arg0: i32) -> (i32, i32, i32) {
    %c0_i32 = arith.constant 0 : i32
    %c0_i32_0 = arith.constant 0 : i32
    %c0_i32_1 = arith.constant 0 : i32
    return %arg0, %c0_i32, %c0_i32_0 : i32, i32, i32
  }
  func.func @transform_15(%arg0: i32) -> (i32, i32, i32) {
    %c0_i32 = arith.constant 0 : i32
    %c0_i32_0 = arith.constant 0 : i32
    %c0_i32_1 = arith.constant 0 : i32
    return %arg0, %c0_i32, %c0_i32_0 : i32, i32, i32
  }
  func.func @transform_16(%arg0: i32) -> (i32, i32) {
    %c0_i32 = arith.constant 0 : i32
    %c0_i32_0 = arith.constant 0 : i32
    %c0_i32_1 = arith.constant 0 : i32
    return %c0_i32, %c0_i32_0 : i32, i32
  }
  func.func @transform_17(%arg0: i32) -> (i32, i32) {
    %c0_i32 = arith.constant 0 : i32
    %c0_i32_0 = arith.constant 0 : i32
    %c0_i32_1 = arith.constant 0 : i32
    return %c0_i32, %c0_i32_0 : i32, i32
  }
  func.func @transform_18(%arg0: i32) -> (i32, i32) {
    %c0_i32 = arith.constant 0 : i32
    %c0_i32_0 = arith.constant 0 : i32
    %c0_i32_1 = arith.constant 0 : i32
    return %c0_i32, %c0_i32_0 : i32, i32
  }
}

</mosaic_0001>

<llo_original>
// kernel: tpu_custom_call.1
$region0: #{tpu_custom_call.1}
  #allocation0 [shape = 'u32[]', space=smem, size = 0x4, offset = 0x4, fixed_abs, tag = 'smem constant byte address 0x4 - core index']
  #allocation1 [shape = 'u32[72,128]{1,0:T(1,128)}', space=vmem, size = 0x9000, scoped, tag = 'internal scratch']
  #allocation2 [shape = 'f32[16,32]{1,0:T(8,128)}', space=vmem, size = 0x2000, scoped, tag = 'scratch operand']
  %s0 = inlined_call_operand.hbm [shape: f32[16,32], index: 0, kind: input, shape index: {}]
  %s1 = inlined_call_operand.hbm [shape: f32[1,32], index: 1, kind: input, shape index: {}]
  %s2 = inlined_call_operand.hbm [shape: f32[1,32], index: 2, kind: input, shape index: {}]
  %s3 = inlined_call_operand.vmem [shape: f32[2,1,8], index: 3, kind: input, shape index: {}]
  %s4 = inlined_call_operand.vmem [shape: f32[2,32,96], index: 4, kind: input, shape index: {}]
  %s5 = inlined_call_operand.hbm [shape: f32[2,1,96], index: 5, kind: input, shape index: {}]
  %s6 = inlined_call_operand.vmem [shape: f32[2,32,32], index: 6, kind: input, shape index: {}]
  %s7 = inlined_call_operand.vmem [shape: f32[2,1,32], index: 7, kind: input, shape index: {}]
  %s8 = inlined_call_operand.hbm [shape: f32[2,1,32], index: 8, kind: input, shape index: {}]
  %s9 = inlined_call_operand.vmem [shape: f32[2,1,32], index: 9, kind: input, shape index: {}]
  %s10 = inlined_call_operand.vmem [shape: f32[2,32,64], index: 10, kind: input, shape index: {}]
  %s11 = inlined_call_operand.vmem [shape: f32[2,1,64], index: 11, kind: input, shape index: {}]
  %s12 = inlined_call_operand.vmem [shape: f32[2,64,32], index: 12, kind: input, shape index: {}]
  %s13 = inlined_call_operand.vmem [shape: f32[2,1,32], index: 13, kind: input, shape index: {}]
  %s14 = inlined_call_operand.hbm [shape: f32[2,1,32], index: 14, kind: input, shape index: {}]
  %s15 = inlined_call_operand.vmem [shape: f32[2,1,32], index: 15, kind: input, shape index: {}]
  %s16 = inlined_call_operand.hbm [shape: f32[32,32], index: 16, kind: input, shape index: {}]
  %s17 = inlined_call_operand.vmem [shape: f32[1,32], index: 17, kind: input, shape index: {}]
  %s18 = inlined_call_operand.hbm [shape: f32[2,32], index: 18, kind: output, shape index: {}]
  %s19 = sld [smem:[#allocation0]]
  $region141: #{tpu_custom_call.1} parent=0
    _
  %s21 = ssub.s32 1, %s19
  %s22 = scalar_select 0, %s21, %s19
  $region1: #{tpu_custom_call.1} parent=0
    #allocation3 [shape = 'u8[8192]{0}', space=vmem, size = 0x2000, scoped, tag = 'input window, operand 0, single buffered']
    #allocation4 [shape = 's32[2]{0}', space=sflag, size = 0x8, scoped, tag = 'scoped memory for tpu_custom_call.1']
    #allocation5 [shape = 's32[2]{0}', space=sflag, size = 0x8, scoped, tag = 'scoped memory for tpu_custom_call.1']
    #allocation6 [shape = 'u8[512]{0}', space=vmem, size = 0x400, scoped, tag = 'input window, operand 1, single buffered']
    #allocation7 [shape = 's32[1]{0}', space=sflag, size = 0x4, scoped, tag = 'scoped memory for tpu_custom_call.1']
    #allocation8 [shape = 'u8[512]{0}', space=vmem, size = 0x400, scoped, tag = 'input window, operand 2, single buffered']
    #allocation9 [shape = 'u8[1024]{0}', space=vmem, size = 0x400, scoped, tag = 'input window, operand 5']
    #allocation10 [shape = 's32[2]{0}', space=sflag, size = 0x8, scoped, tag = 'scoped memory for tpu_custom_call.1']
    #allocation11 [shape = 'u8[1024]{0}', space=vmem, size = 0x400, scoped, tag = 'input window, operand 8']
    #allocation12 [shape = 'u8[1024]{0}', space=vmem, size = 0x400, scoped, tag = 'input window, operand 14']
    #allocation13 [shape = 's32[2]{0}', space=sflag, size = 0x8, scoped, tag = 'scoped memory for tpu_custom_call.1']
    #allocation14 [shape = 'u8[16384]{0}', space=vmem, size = 0x4000, scoped, tag = 'input window, operand 16, single buffered']
    #allocation15 [shape = 'u8[1024]{0}', space=vmem, size = 0x400, scoped, tag = 'output window, operand 0, single buffered']
    %23 = vsyncpa [#allocation4], 0
    %24 = vsyncpa [#allocation7], 0
    %25 = vsyncpa [#allocation10], 0
    %s26 = scalar_lea.sflag [#allocation10], 1
    %27 = vsyncpa %s26, 0
    %28 = vsyncpa [#allocation13], 0
    %s29 = scalar_lea.sflag [#allocation13], 1
    %30 = vsyncpa %s29, 0
    %31 = vsyncpa [#allocation5], 0
    loop: start=0, step=1, limit=4
    $region2: #{tpu_custom_call.1} parent=1 // loop_pre_header
      _
    $region3: #{tpu_custom_call.1} parent=1 // loop_header
      %s33 = sphi 0, %s37
      %p34 = scmp.ge.s32.totalorder %s33, 4
      %s41 = sphi 0, %s41
      %s43 = sphi 0, %s41
      %s44 = sphi 0, %s43
      %s58 = sphi 0, %s44
      %s62 = sphi 0, %s62
      %s64 = sphi 0, %s62
      %s65 = sphi 0, %s64
      %s79 = sphi 0, %s65
      %s83 = sphi 0, %s83
      %s85 = sphi 0, %s83
      %s86 = sphi 0, %s85
      %s100 = sphi 0, %s86
      %s104 = sphi 0, %s104
      %s106 = sphi 0, %s104
      %s107 = sphi 0, %s106
      %s121 = sphi 0, %s107
      %s127 = sphi 0, %s129
      %s130 = sphi 0, %s127
      %s131 = sphi 0, %s130
      %s147 = sphi 0, %s131
      %s153 = sphi 0, %s155
      %s156 = sphi 0, %s153
      %s157 = sphi 0, %s156
      %s173 = sphi 0, %s157
      %s179 = sphi 0, %s181
      %s182 = sphi 0, %s179
      %s183 = sphi 0, %s182
      %s199 = sphi 0, %s183
      %s205 = sphi 0, %s207
      %s208 = sphi 0, %s205
      %s209 = sphi 0, %s208
      %s225 = sphi 0, %s209
      %s231 = sphi 0, %s233
      %s234 = sphi 0, %s231
      %s235 = sphi 0, %s234
      %s251 = sphi 0, %s235
      %s257 = sphi 0, %s259
      %s260 = sphi 0, %s257
      %s261 = sphi 0, %s260
      %s277 = sphi 0, %s261
      %s283 = sphi 0, %s285
      %s286 = sphi 0, %s283
      %s287 = sphi 0, %s286
      %s303 = sphi 0, %s287
      %s309 = sphi 0, %s311
      %s312 = sphi 0, %s309
      %s313 = sphi 0, %s312
      %s329 = sphi 0, %s313
      %s335 = sphi 0, %s337
      %s338 = sphi 0, %s335
      %s339 = sphi 0, %s338
      %s355 = sphi 0, %s339
      %s361 = sphi 0, %s363
      %s364 = sphi 0, %s361
      %s365 = sphi 0, %s364
      %s381 = sphi 0, %s365
      %s387 = sphi 0, %s389
      %s390 = sphi 0, %s387
      %s391 = sphi 0, %s390
      %s407 = sphi 0, %s391
      %s413 = sphi 0, %s415
      %s416 = sphi 0, %s413
      %s417 = sphi 0, %s416
      %s433 = sphi 0, %s417
      %s437 = sphi 0, %s437
      %s439 = sphi 0, %s437
      %s440 = sphi 0, %s439
      %s454 = sphi 0, %s440
      %s458 = sphi 0, %s458
      %s460 = sphi 0, %s458
      %s461 = sphi 0, %s460
      %s475 = sphi 0, %s461
      %s479 = sphi 0, %s479
      %s481 = sphi 0, %s479
      %s482 = sphi 0, %s481
      %s496 = sphi 0, %s482
    $region4: #{tpu_custom_call.1} parent=1 // loop_header_branch
      %36 = sbr.rel (%p34) target = $region8
    $region5: #{tpu_custom_call.1} parent=1 // loop_body
      %s38 = ssub.s32 %s33, 1
      %s39 = ssub.s32 %s33, 2
      %s40 = sadd.s32 %s33, 1
      %s42 = sadd.s32 %s41, 1
      %p45 = scmp.eq.s32.totalorder %s33, 1
      %p46 = scmp.ne.s32.totalorder %s41, %s43
      %p47 = scmp.eq.s32.totalorder %s33, 0
      %p48 = por %p46, %p47
      %p49 = scmp.ne.s32.totalorder %s41, %s43
      %p50 = scmp.eq.s32.totalorder %s38, 1
      %p51 = por %p49, %p50
      %p52 = scmp.ne.s32.totalorder %s43, %s44
      %p53 = scmp.eq.s32.totalorder %s38, 0
      %p54 = por %p52, %p53
      %p55 = scmp.ne.s32.totalorder %s43, %s44
      %p56 = scmp.eq.s32.totalorder %s39, 1
      %p57 = por %p55, %p56
      %p59 = scmp.ne.s32.totalorder %s44, %s58
      %p60 = scmp.eq.s32.totalorder %s39, 0
      %p61 = por %p59, %p60
      %s63 = sadd.s32 %s62, 1
      %p66 = scmp.eq.s32.totalorder %s33, 1
      %p67 = scmp.ne.s32.totalorder %s62, %s64
      %p68 = scmp.eq.s32.totalorder %s33, 0
      %p69 = por %p67, %p68
      %p70 = scmp.ne.s32.totalorder %s62, %s64
      %p71 = scmp.eq.s32.totalorder %s38, 1
      %p72 = por %p70, %p71
      %p73 = scmp.ne.s32.totalorder %s64, %s65
      %p74 = scmp.eq.s32.totalorder %s38, 0
      %p75 = por %p73, %p74
      %p76 = scmp.ne.s32.totalorder %s64, %s65
      %p77 = scmp.eq.s32.totalorder %s39, 1
      %p78 = por %p76, %p77
      %p80 = scmp.ne.s32.totalorder %s65, %s79
      %p81 = scmp.eq.s32.totalorder %s39, 0
      %p82 = por %p80, %p81
      %s84 = sadd.s32 %s83, 1
      %p87 = scmp.eq.s32.totalorder %s33, 1
      %p88 = scmp.ne.s32.totalorder %s83, %s85
      %p89 = scmp.eq.s32.totalorder %s33, 0
      %p90 = por %p88, %p89
      %p91 = scmp.ne.s32.totalorder %s83, %s85
      %p92 = scmp.eq.s32.totalorder %s38, 1
      %p93 = por %p91, %p92
      %p94 = scmp.ne.s32.totalorder %s85, %s86
      %p95 = scmp.eq.s32.totalorder %s38, 0
      %p96 = por %p94, %p95
      %p97 = scmp.ne.s32.totalorder %s85, %s86
      %p98 = scmp.eq.s32.totalorder %s39, 1
      %p99 = por %p97, %p98
      %p101 = scmp.ne.s32.totalorder %s86, %s100
      %p102 = scmp.eq.s32.totalorder %s39, 0
      %p103 = por %p101, %p102
      %s105 = sadd.s32 %s104, 1
      %p108 = scmp.eq.s32.totalorder %s33, 1
      %p109 = scmp.ne.s32.totalorder %s104, %s106
      %p110 = scmp.eq.s32.totalorder %s33, 0
      %p111 = por %p109, %p110
      %p112 = scmp.ne.s32.totalorder %s104, %s106
      %p113 = scmp.eq.s32.totalorder %s38, 1
      %p114 = por %p112, %p113
      %p115 = scmp.ne.s32.totalorder %s106, %s107
      %p116 = scmp.eq.s32.totalorder %s38, 0
      %p117 = por %p115, %p116
      %p118 = scmp.ne.s32.totalorder %s106, %s107
      %p119 = scmp.eq.s32.totalorder %s39, 1
      %p120 = por %p118, %p119
      %p122 = scmp.ne.s32.totalorder %s107, %s121
      %p123 = scmp.eq.s32.totalorder %s39, 0
      %p124 = por %p122, %p123
      %s125 = ssub.s32 %s33, %s40
      %p126 = scmp.eq.s32.totalorder %s125, 0
      %s128 = sadd.s32 %s127, 1
      %s129 = scalar_select %p126, %s127, %s128
      %p132 = pneg %p126
      %p133 = scmp.eq.s32.totalorder %s33, 1
      %p134 = por %p132, %p133
      %p135 = scmp.ne.s32.totalorder %s127, %s130
      %p136 = scmp.eq.s32.totalorder %s33, 0
      %p137 = por %p135, %p136
      %p138 = scmp.ne.s32.totalorder %s127, %s130
      %p139 = scmp.eq.s32.totalorder %s38, 1
      %p140 = por %p138, %p139
      %p141 = scmp.ne.s32.totalorder %s130, %s131
      %p142 = scmp.eq.s32.totalorder %s38, 0
      %p143 = por %p141, %p142
      %p144 = scmp.ne.s32.totalorder %s130, %s131
      %p145 = scmp.eq.s32.totalorder %s39, 1
      %p146 = por %p144, %p145
      %p148 = scmp.ne.s32.totalorder %s131, %s147
      %p149 = scmp.eq.s32.totalorder %s39, 0
      %p150 = por %p148, %p149
      %s151 = ssub.s32 %s33, %s40
      %p152 = scmp.eq.s32.totalorder %s151, 0
      %s154 = sadd.s32 %s153, 1
      %s155 = scalar_select %p152, %s153, %s154
      %p158 = pneg %p152
      %p159 = scmp.eq.s32.totalorder %s33, 1
      %p160 = por %p158, %p159
      %p161 = scmp.ne.s32.totalorder %s153, %s156
      %p162 = scmp.eq.s32.totalorder %s33, 0
      %p163 = por %p161, %p162
      %p164 = scmp.ne.s32.totalorder %s153, %s156
      %p165 = scmp.eq.s32.totalorder %s38, 1
      %p166 = por %p164, %p165
      %p167 = scmp.ne.s32.totalorder %s156, %s157
      %p168 = scmp.eq.s32.totalorder %s38, 0
      %p169 = por %p167, %p168
      %p170 = scmp.ne.s32.totalorder %s156, %s157
      %p171 = scmp.eq.s32.totalorder %s39, 1
      %p172 = por %p170, %p171
      %p174 = scmp.ne.s32.totalorder %s157, %s173
      %p175 = scmp.eq.s32.totalorder %s39, 0
      %p176 = por %p174, %p175
      %s177 = ssub.s32 %s33, %s40
      %p178 = scmp.eq.s32.totalorder %s177, 0
      %s180 = sadd.s32 %s179, 1
      %s181 = scalar_select %p178, %s179, %s180
      %p184 = pneg %p178
      %p185 = scmp.eq.s32.totalorder %s33, 1
      %p186 = por %p184, %p185
      %p187 = scmp.ne.s32.totalorder %s179, %s182
      %p188 = scmp.eq.s32.totalorder %s33, 0
      %p189 = por %p187, %p188
      %p190 = scmp.ne.s32.totalorder %s179, %s182
      %p191 = scmp.eq.s32.totalorder %s38, 1
      %p192 = por %p190, %p191
      %p193 = scmp.ne.s32.totalorder %s182, %s183
      %p194 = scmp.eq.s32.totalorder %s38, 0
      %p195 = por %p193, %p194
      %p196 = scmp.ne.s32.totalorder %s182, %s183
      %p197 = scmp.eq.s32.totalorder %s39, 1
      %p198 = por %p196, %p197
      %p200 = scmp.ne.s32.totalorder %s183, %s199
      %p201 = scmp.eq.s32.totalorder %s39, 0
      %p202 = por %p200, %p201
      %s203 = ssub.s32 %s33, %s40
      %p204 = scmp.eq.s32.totalorder %s203, 0
      %s206 = sadd.s32 %s205, 1
      %s207 = scalar_select %p204, %s205, %s206
      %p210 = pneg %p204
      %p211 = scmp.eq.s32.totalorder %s33, 1
      %p212 = por %p210, %p211
      %p213 = scmp.ne.s32.totalorder %s205, %s208
      %p214 = scmp.eq.s32.totalorder %s33, 0
      %p215 = por %p213, %p214
      %p216 = scmp.ne.s32.totalorder %s205, %s208
      %p217 = scmp.eq.s32.totalorder %s38, 1
      %p218 = por %p216, %p217
      %p219 = scmp.ne.s32.totalorder %s208, %s209
      %p220 = scmp.eq.s32.totalorder %s38, 0
      %p221 = por %p219, %p220
      %p222 = scmp.ne.s32.totalorder %s208, %s209
      %p223 = scmp.eq.s32.totalorder %s39, 1
      %p224 = por %p222, %p223
      %p226 = scmp.ne.s32.totalorder %s209, %s225
      %p227 = scmp.eq.s32.totalorder %s39, 0
      %p228 = por %p226, %p227
      %s229 = ssub.s32 %s33, %s40
      %p230 = scmp.eq.s32.totalorder %s229, 0
      %s232 = sadd.s32 %s231, 1
      %s233 = scalar_select %p230, %s231, %s232
      %p236 = pneg %p230
      %p237 = scmp.eq.s32.totalorder %s33, 1
      %p238 = por %p236, %p237
      %p239 = scmp.ne.s32.totalorder %s231, %s234
      %p240 = scmp.eq.s32.totalorder %s33, 0
      %p241 = por %p239, %p240
      %p242 = scmp.ne.s32.totalorder %s231, %s234
      %p243 = scmp.eq.s32.totalorder %s38, 1
      %p244 = por %p242, %p243
      %p245 = scmp.ne.s32.totalorder %s234, %s235
      %p246 = scmp.eq.s32.totalorder %s38, 0
      %p247 = por %p245, %p246
      %p248 = scmp.ne.s32.totalorder %s234, %s235
      %p249 = scmp.eq.s32.totalorder %s39, 1
      %p250 = por %p248, %p249
      %p252 = scmp.ne.s32.totalorder %s235, %s251
      %p253 = scmp.eq.s32.totalorder %s39, 0
      %p254 = por %p252, %p253
      %s255 = ssub.s32 %s33, %s40
      %p256 = scmp.eq.s32.totalorder %s255, 0
      %s258 = sadd.s32 %s257, 1
      %s259 = scalar_select %p256, %s257, %s258
      %p262 = pneg %p256
      %p263 = scmp.eq.s32.totalorder %s33, 1
      %p264 = por %p262, %p263
      %p265 = scmp.ne.s32.totalorder %s257, %s260
      %p266 = scmp.eq.s32.totalorder %s33, 0
      %p267 = por %p265, %p266
      %p268 = scmp.ne.s32.totalorder %s257, %s260
      %p269 = scmp.eq.s32.totalorder %s38, 1
      %p270 = por %p268, %p269
      %p271 = scmp.ne.s32.totalorder %s260, %s261
      %p272 = scmp.eq.s32.totalorder %s38, 0
      %p273 = por %p271, %p272
      %p274 = scmp.ne.s32.totalorder %s260, %s261
      %p275 = scmp.eq.s32.totalorder %s39, 1
      %p276 = por %p274, %p275
      %p278 = scmp.ne.s32.totalorder %s261, %s277
      %p279 = scmp.eq.s32.totalorder %s39, 0
      %p280 = por %p278, %p279
      %s281 = ssub.s32 %s33, %s40
      %p282 = scmp.eq.s32.totalorder %s281, 0
      %s284 = sadd.s32 %s283, 1
      %s285 = scalar_select %p282, %s283, %s284
      %p288 = pneg %p282
      %p289 = scmp.eq.s32.totalorder %s33, 1
      %p290 = por %p288, %p289
      %p291 = scmp.ne.s32.totalorder %s283, %s286
      %p292 = scmp.eq.s32.totalorder %s33, 0
      %p293 = por %p291, %p292
      %p294 = scmp.ne.s32.totalorder %s283, %s286
      %p295 = scmp.eq.s32.totalorder %s38, 1
      %p296 = por %p294, %p295
      %p297 = scmp.ne.s32.totalorder %s286, %s287
      %p298 = scmp.eq.s32.totalorder %s38, 0
      %p299 = por %p297, %p298
      %p300 = scmp.ne.s32.totalorder %s286, %s287
      %p301 = scmp.eq.s32.totalorder %s39, 1
      %p302 = por %p300, %p301
      %p304 = scmp.ne.s32.totalorder %s287, %s303
      %p305 = scmp.eq.s32.totalorder %s39, 0
      %p306 = por %p304, %p305
      %s307 = ssub.s32 %s33, %s40
      %p308 = scmp.eq.s32.totalorder %s307, 0
      %s310 = sadd.s32 %s309, 1
      %s311 = scalar_select %p308, %s309, %s310
      %p314 = pneg %p308
      %p315 = scmp.eq.s32.totalorder %s33, 1
      %p316 = por %p314, %p315
      %p317 = scmp.ne.s32.totalorder %s309, %s312
      %p318 = scmp.eq.s32.totalorder %s33, 0
      %p319 = por %p317, %p318
      %p320 = scmp.ne.s32.totalorder %s309, %s312
      %p321 = scmp.eq.s32.totalorder %s38, 1
      %p322 = por %p320, %p321
      %p323 = scmp.ne.s32.totalorder %s312, %s313
      %p324 = scmp.eq.s32.totalorder %s38, 0
      %p325 = por %p323, %p324
      %p326 = scmp.ne.s32.totalorder %s312, %s313
      %p327 = scmp.eq.s32.totalorder %s39, 1
      %p328 = por %p326, %p327
      %p330 = scmp.ne.s32.totalorder %s313, %s329
      %p331 = scmp.eq.s32.totalorder %s39, 0
      %p332 = por %p330, %p331
      %s333 = ssub.s32 %s33, %s40
      %p334 = scmp.eq.s32.totalorder %s333, 0
      %s336 = sadd.s32 %s335, 1
      %s337 = scalar_select %p334, %s335, %s336
      %p340 = pneg %p334
      %p341 = scmp.eq.s32.totalorder %s33, 1
      %p342 = por %p340, %p341
      %p343 = scmp.ne.s32.totalorder %s335, %s338
      %p344 = scmp.eq.s32.totalorder %s33, 0
      %p345 = por %p343, %p344
      %p346 = scmp.ne.s32.totalorder %s335, %s338
      %p347 = scmp.eq.s32.totalorder %s38, 1
      %p348 = por %p346, %p347
      %p349 = scmp.ne.s32.totalorder %s338, %s339
      %p350 = scmp.eq.s32.totalorder %s38, 0
      %p351 = por %p349, %p350
      %p352 = scmp.ne.s32.totalorder %s338, %s339
      %p353 = scmp.eq.s32.totalorder %s39, 1
      %p354 = por %p352, %p353
      %p356 = scmp.ne.s32.totalorder %s339, %s355
      %p357 = scmp.eq.s32.totalorder %s39, 0
      %p358 = por %p356, %p357
      %s359 = ssub.s32 %s33, %s40
      %p360 = scmp.eq.s32.totalorder %s359, 0
      %s362 = sadd.s32 %s361, 1
      %s363 = scalar_select %p360, %s361, %s362
      %p366 = pneg %p360
      %p367 = scmp.eq.s32.totalorder %s33, 1
      %p368 = por %p366, %p367
      %p369 = scmp.ne.s32.totalorder %s361, %s364
      %p370 = scmp.eq.s32.totalorder %s33, 0
      %p371 = por %p369, %p370
      %p372 = scmp.ne.s32.totalorder %s361, %s364
      %p373 = scmp.eq.s32.totalorder %s38, 1
      %p374 = por %p372, %p373
      %p375 = scmp.ne.s32.totalorder %s364, %s365
      %p376 = scmp.eq.s32.totalorder %s38, 0
      %p377 = por %p375, %p376
      %p378 = scmp.ne.s32.totalorder %s364, %s365
      %p379 = scmp.eq.s32.totalorder %s39, 1
      %p380 = por %p378, %p379
      %p382 = scmp.ne.s32.totalorder %s365, %s381
      %p383 = scmp.eq.s32.totalorder %s39, 0
      %p384 = por %p382, %p383
      %s385 = ssub.s32 %s33, %s40
      %p386 = scmp.eq.s32.totalorder %s385, 0
      %s388 = sadd.s32 %s387, 1
      %s389 = scalar_select %p386, %s387, %s388
      %p392 = pneg %p386
      %p393 = scmp.eq.s32.totalorder %s33, 1
      %p394 = por %p392, %p393
      %p395 = scmp.ne.s32.totalorder %s387, %s390
      %p396 = scmp.eq.s32.totalorder %s33, 0
      %p397 = por %p395, %p396
      %p398 = scmp.ne.s32.totalorder %s387, %s390
      %p399 = scmp.eq.s32.totalorder %s38, 1
      %p400 = por %p398, %p399
      %p401 = scmp.ne.s32.totalorder %s390, %s391
      %p402 = scmp.eq.s32.totalorder %s38, 0
      %p403 = por %p401, %p402
      %p404 = scmp.ne.s32.totalorder %s390, %s391
      %p405 = scmp.eq.s32.totalorder %s39, 1
      %p406 = por %p404, %p405
      %p408 = scmp.ne.s32.totalorder %s391, %s407
      %p409 = scmp.eq.s32.totalorder %s39, 0
      %p410 = por %p408, %p409
      %s411 = ssub.s32 %s33, %s40
      %p412 = scmp.eq.s32.totalorder %s411, 0
      %s414 = sadd.s32 %s413, 1
      %s415 = scalar_select %p412, %s413, %s414
      %p418 = pneg %p412
      %p419 = scmp.eq.s32.totalorder %s33, 1
      %p420 = por %p418, %p419
      %p421 = scmp.ne.s32.totalorder %s413, %s416
      %p422 = scmp.eq.s32.totalorder %s33, 0
      %p423 = por %p421, %p422
      %p424 = scmp.ne.s32.totalorder %s413, %s416
      %p425 = scmp.eq.s32.totalorder %s38, 1
      %p426 = por %p424, %p425
      %p427 = scmp.ne.s32.totalorder %s416, %s417
      %p428 = scmp.eq.s32.totalorder %s38, 0
      %p429 = por %p427, %p428
      %p430 = scmp.ne.s32.totalorder %s416, %s417
      %p431 = scmp.eq.s32.totalorder %s39, 1
      %p432 = por %p430, %p431
      %p434 = scmp.ne.s32.totalorder %s417, %s433
      %p435 = scmp.eq.s32.totalorder %s39, 0
      %p436 = por %p434, %p435
      %s438 = sadd.s32 %s437, 1
      %p441 = scmp.eq.s32.totalorder %s33, 1
      %p442 = scmp.ne.s32.totalorder %s437, %s439
      %p443 = scmp.eq.s32.totalorder %s33, 0
      %p444 = por %p442, %p443
      %p445 = scmp.ne.s32.totalorder %s437, %s439
      %p446 = scmp.eq.s32.totalorder %s38, 1
      %p447 = por %p445, %p446
      %p448 = scmp.ne.s32.totalorder %s439, %s440
      %p449 = scmp.eq.s32.totalorder %s38, 0
      %p450 = por %p448, %p449
      %p451 = scmp.ne.s32.totalorder %s439, %s440
      %p452 = scmp.eq.s32.totalorder %s39, 1
      %p453 = por %p451, %p452
      %p455 = scmp.ne.s32.totalorder %s440, %s454
      %p456 = scmp.eq.s32.totalorder %s39, 0
      %p457 = por %p455, %p456
      %s459 = sadd.s32 %s458, 1
      %p462 = scmp.eq.s32.totalorder %s33, 1
      %p463 = scmp.ne.s32.totalorder %s458, %s460
      %p464 = scmp.eq.s32.totalorder %s33, 0
      %p465 = por %p463, %p464
      %p466 = scmp.ne.s32.totalorder %s458, %s460
      %p467 = scmp.eq.s32.totalorder %s38, 1
      %p468 = por %p466, %p467
      %p469 = scmp.ne.s32.totalorder %s460, %s461
      %p470 = scmp.eq.s32.totalorder %s38, 0
      %p471 = por %p469, %p470
      %p472 = scmp.ne.s32.totalorder %s460, %s461
      %p473 = scmp.eq.s32.totalorder %s39, 1
      %p474 = por %p472, %p473
      %p476 = scmp.ne.s32.totalorder %s461, %s475
      %p477 = scmp.eq.s32.totalorder %s39, 0
      %p478 = por %p476, %p477
      %s480 = sadd.s32 %s479, 1
      %p483 = scmp.eq.s32.totalorder %s33, 1
      %p484 = scmp.ne.s32.totalorder %s479, %s481
      %p485 = scmp.eq.s32.totalorder %s33, 0
      %p486 = por %p484, %p485
      %p487 = scmp.ne.s32.totalorder %s479, %s481
      %p488 = scmp.eq.s32.totalorder %s38, 1
      %p489 = por %p487, %p488
      %p490 = scmp.ne.s32.totalorder %s481, %s482
      %p491 = scmp.eq.s32.totalorder %s38, 0
      %p492 = por %p490, %p491
      %p493 = scmp.ne.s32.totalorder %s481, %s482
      %p494 = scmp.eq.s32.totalorder %s39, 1
      %p495 = por %p493, %p494
      %p497 = scmp.ne.s32.totalorder %s482, %s496
      %p498 = scmp.eq.s32.totalorder %s39, 0
      %p499 = por %p497, %p498
      %p500 = scmp.le.s32.totalorder 1, %s33
      %p501 = scmp.lt.s32.totalorder %s33, 3
      %p502 = pnand %p500, %p501
      %p503 = pneg %p502
      // Predicated region
      $region9: #{tpu_custom_call.1} parent=5 // pred_check
        _
      $region10: #{tpu_custom_call.1} parent=5 // pred_check_branch
        %505 = sbr.rel (%p502) target = $region12
      $region11: #{tpu_custom_call.1} parent=5 // pred_region
        %s506 = ssub.s32 %s33, 1
        // Predicated region
        $region13: #{tpu_custom_call.1} parent=11 // pred_check
          %p507 = pneg %p54
        $region14: #{tpu_custom_call.1} parent=11 // pred_check_branch
          %509 = sbr.rel (%p507) target = $region16
        $region15: #{tpu_custom_call.1} parent=11 // pred_region
          %511 = vsyncadd [#allocation4], 0
          %s512 = sshll.u32 %s0, 4
          %s513 = int_to_ptr.hbm [resolvable:$true] %s512
          %s514 = sshll.u32 [#allocation3], 4
          %s515 = int_to_ptr.vmem [resolvable:$true] %s514
          %520 = dma.hbm_to_vmem [thread:$0]  %s513, 256, %s515, [#allocation4], 128, 128, 8
        $region16: #{tpu_custom_call.1} parent=11 // pred_fallthru
          _
        // Predicated region
        $region17: #{tpu_custom_call.1} parent=11 // pred_check
          %p521 = pneg %p75
        $region18: #{tpu_custom_call.1} parent=11 // pred_check_branch
          %523 = sbr.rel (%p521) target = $region20
        $region19: #{tpu_custom_call.1} parent=11 // pred_region
          %525 = vsyncadd [#allocation7], 0
          %s527 = sshll.u32 %s1, 4
          %s528 = int_to_ptr.hbm [resolvable:$true] %s527
          %s529 = sshll.u32 [#allocation6], 4
          %s530 = int_to_ptr.vmem [resolvable:$true] %s529
          %532 = dma.hbm_to_vmem [thread:$0]  %s528, 16, %s530, [#allocation7]
        $region20: #{tpu_custom_call.1} parent=11 // pred_fallthru
          _
        // Predicated region
        $region21: #{tpu_custom_call.1} parent=11 // pred_check
          %p533 = pneg %p96
        $region22: #{tpu_custom_call.1} parent=11 // pred_check_branch
          %535 = sbr.rel (%p533) target = $region24
        $region23: #{tpu_custom_call.1} parent=11 // pred_region
          %537 = vsyncadd [#allocation7], 0
          %s539 = sshll.u32 %s2, 4
          %s540 = int_to_ptr.hbm [resolvable:$true] %s539
          %s541 = sshll.u32 [#allocation8], 4
          %s542 = int_to_ptr.vmem [resolvable:$true] %s541
          %544 = dma.hbm_to_vmem [thread:$0]  %s540, 16, %s542, [#allocation7]
        $region24: #{tpu_custom_call.1} parent=11 // pred_fallthru
          _
        // Predicated region
        $region25: #{tpu_custom_call.1} parent=11 // pred_check
          %p545 = pneg %p117
        $region26: #{tpu_custom_call.1} parent=11 // pred_check_branch
          %547 = sbr.rel (%p545) target = $region28
        $region27: #{tpu_custom_call.1} parent=11 // pred_region
          _
        $region28: #{tpu_custom_call.1} parent=11 // pred_fallthru
          _
        // Predicated region
        $region29: #{tpu_custom_call.1} parent=11 // pred_check
          %p548 = pneg %p450
        $region30: #{tpu_custom_call.1} parent=11 // pred_check_branch
          %550 = sbr.rel (%p548) target = $region32
        $region31: #{tpu_custom_call.1} parent=11 // pred_region
          %552 = vsyncadd [#allocation13], 0
          %s553 = sshll.u32 %s16, 4
          %s554 = int_to_ptr.hbm [resolvable:$true] %s553
          %s555 = sshll.u32 [#allocation14], 4
          %s556 = int_to_ptr.vmem [resolvable:$true] %s555
          %561 = dma.hbm_to_vmem [thread:$0]  %s554, 512, %s556, [#allocation13], 128, 128, 8
        $region32: #{tpu_custom_call.1} parent=11 // pred_fallthru
          _
        // Predicated region
        $region33: #{tpu_custom_call.1} parent=11 // pred_check
          %p562 = pneg %p471
        $region34: #{tpu_custom_call.1} parent=11 // pred_check_branch
          %564 = sbr.rel (%p562) target = $region36
        $region35: #{tpu_custom_call.1} parent=11 // pred_region
          _
        $region36: #{tpu_custom_call.1} parent=11 // pred_fallthru
          _
      $region12: #{tpu_custom_call.1} parent=5 // pred_fallthru
        _
      %p565 = scmp.lt.s32.totalorder %s33, 2
      // Predicated region
      $region37: #{tpu_custom_call.1} parent=5 // pred_check
        %p566 = pneg %p565
      $region38: #{tpu_custom_call.1} parent=5 // pred_check_branch
        %568 = sbr.rel (%p566) target = $region40
      $region39: #{tpu_custom_call.1} parent=5 // pred_region
        // Predicated region
        $region41: #{tpu_custom_call.1} parent=39 // pred_check
          %p569 = pneg %p137
        $region42: #{tpu_custom_call.1} parent=39 // pred_check_branch
          %571 = sbr.rel (%p569) target = $region44
        $region43: #{tpu_custom_call.1} parent=39 // pred_region
          %p572 = scmp.lt.s32.totalorder %s33, 1
          %s573 = scalar_select %p572, %s33, 1
          %s574 = smul.addr %s573, 4
          %s575 = smul.addr %s574, 8
          %s576 = scalar_lea.vmem %s4, %s575
        $region44: #{tpu_custom_call.1} parent=39 // pred_fallthru
          _
        // Predicated region
        $region45: #{tpu_custom_call.1} parent=39 // pred_check
          %p577 = pneg %p163
        $region46: #{tpu_custom_call.1} parent=39 // pred_check_branch
          %579 = sbr.rel (%p577) target = $region48
        $region47: #{tpu_custom_call.1} parent=39 // pred_region
          %s580 = sand.u32 %s33, 1
          %s581 = scalar_lea.sflag [#allocation10], %s580
          %s582 = sand.u32 %s153, 1
          %s583 = scalar_lea.vmem [#allocation9], %s582
          %585 = vsyncadd %s581, 0
          %s586 = scalar_lea.hbm %s5, %s33
          %s588 = sshll.u32 %s586, 4
          %s589 = int_to_ptr.hbm [resolvable:$true] %s588
          %s590 = sshll.u32 %s583, 4
          %s591 = int_to_ptr.vmem [resolvable:$true] %s590
          %593 = dma.hbm_to_vmem [thread:$0]  %s589, 16, %s591, %s581
        $region48: #{tpu_custom_call.1} parent=39 // pred_fallthru
          _
        // Predicated region
        $region49: #{tpu_custom_call.1} parent=39 // pred_check
          %p594 = pneg %p189
        $region50: #{tpu_custom_call.1} parent=39 // pred_check_branch
          %596 = sbr.rel (%p594) target = $region52
        $region51: #{tpu_custom_call.1} parent=39 // pred_region
          %p597 = scmp.lt.s32.totalorder %s33, 1
          %s598 = scalar_select %p597, %s33, 1
          %s599 = smul.addr %s598, 4
          %s600 = smul.addr %s599, 8
          %s601 = scalar_lea.vmem %s6, %s600
        $region52: #{tpu_custom_call.1} parent=39 // pred_fallthru
          _
        // Predicated region
        $region53: #{tpu_custom_call.1} parent=39 // pred_check
          %p602 = pneg %p215
        $region54: #{tpu_custom_call.1} parent=39 // pred_check_branch
          %604 = sbr.rel (%p602) target = $region56
        $region55: #{tpu_custom_call.1} parent=39 // pred_region
          %p605 = scmp.lt.s32.totalorder %s33, 1
          %s606 = scalar_select %p605, %s33, 1
          %s607 = scalar_lea.vmem %s7, %s606
        $region56: #{tpu_custom_call.1} parent=39 // pred_fallthru
          _
        // Predicated region
        $region57: #{tpu_custom_call.1} parent=39 // pred_check
          %p608 = pneg %p241
        $region58: #{tpu_custom_call.1} parent=39 // pred_check_branch
          %610 = sbr.rel (%p608) target = $region60
        $region59: #{tpu_custom_call.1} parent=39 // pred_region
          %s611 = sand.u32 %s33, 1
          %s612 = scalar_lea.sflag [#allocation10], %s611
          %s613 = sand.u32 %s231, 1
          %s614 = scalar_lea.vmem [#allocation11], %s613
          %616 = vsyncadd %s612, 0
          %s617 = scalar_lea.hbm %s8, %s33
          %s619 = sshll.u32 %s617, 4
          %s620 = int_to_ptr.hbm [resolvable:$true] %s619
          %s621 = sshll.u32 %s614, 4
          %s622 = int_to_ptr.vmem [resolvable:$true] %s621
          %624 = dma.hbm_to_vmem [thread:$0]  %s620, 16, %s622, %s612
        $region60: #{tpu_custom_call.1} parent=39 // pred_fallthru
          _
        // Predicated region
        $region61: #{tpu_custom_call.1} parent=39 // pred_check
          %p625 = pneg %p267
        $region62: #{tpu_custom_call.1} parent=39 // pred_check_branch
          %627 = sbr.rel (%p625) target = $region64
        $region63: #{tpu_custom_call.1} parent=39 // pred_region
          %p628 = scmp.lt.s32.totalorder %s33, 1
          %s629 = scalar_select %p628, %s33, 1
          %s630 = scalar_lea.vmem %s9, %s629
        $region64: #{tpu_custom_call.1} parent=39 // pred_fallthru
          _
        // Predicated region
        $region65: #{tpu_custom_call.1} parent=39 // pred_check
          %p631 = pneg %p293
        $region66: #{tpu_custom_call.1} parent=39 // pred_check_branch
          %633 = sbr.rel (%p631) target = $region68
        $region67: #{tpu_custom_call.1} parent=39 // pred_region
          %p634 = scmp.lt.s32.totalorder %s33, 1
          %s635 = scalar_select %p634, %s33, 1
          %s636 = smul.addr %s635, 4
          %s637 = smul.addr %s636, 8
          %s638 = scalar_lea.vmem %s10, %s637
        $region68: #{tpu_custom_call.1} parent=39 // pred_fallthru
          _
        // Predicated region
        $region69: #{tpu_custom_call.1} parent=39 // pred_check
          %p639 = pneg %p319
        $region70: #{tpu_custom_call.1} parent=39 // pred_check_branch
          %641 = sbr.rel (%p639) target = $region72
        $region71: #{tpu_custom_call.1} parent=39 // pred_region
          %p642 = scmp.lt.s32.totalorder %s33, 1
          %s643 = scalar_select %p642, %s33, 1
          %s644 = scalar_lea.vmem %s11, %s643
        $region72: #{tpu_custom_call.1} parent=39 // pred_fallthru
          _
        // Predicated region
        $region73: #{tpu_custom_call.1} parent=39 // pred_check
          %p645 = pneg %p345
        $region74: #{tpu_custom_call.1} parent=39 // pred_check_branch
          %647 = sbr.rel (%p645) target = $region76
        $region75: #{tpu_custom_call.1} parent=39 // pred_region
          %p648 = scmp.lt.s32.totalorder %s33, 1
          %s649 = scalar_select %p648, %s33, 1
          %s650 = smul.addr %s649, 8
          %s651 = smul.addr %s650, 8
          %s652 = scalar_lea.vmem %s12, %s651
        $region76: #{tpu_custom_call.1} parent=39 // pred_fallthru
          _
        // Predicated region
        $region77: #{tpu_custom_call.1} parent=39 // pred_check
          %p653 = pneg %p371
        $region78: #{tpu_custom_call.1} parent=39 // pred_check_branch
          %655 = sbr.rel (%p653) target = $region80
        $region79: #{tpu_custom_call.1} parent=39 // pred_region
          %p656 = scmp.lt.s32.totalorder %s33, 1
          %s657 = scalar_select %p656, %s33, 1
          %s658 = scalar_lea.vmem %s13, %s657
        $region80: #{tpu_custom_call.1} parent=39 // pred_fallthru
          _
        // Predicated region
        $region81: #{tpu_custom_call.1} parent=39 // pred_check
          %p659 = pneg %p397
        $region82: #{tpu_custom_call.1} parent=39 // pred_check_branch
          %661 = sbr.rel (%p659) target = $region84
        $region83: #{tpu_custom_call.1} parent=39 // pred_region
          %s662 = sand.u32 %s33, 1
          %s663 = scalar_lea.sflag [#allocation13], %s662
          %s664 = sand.u32 %s387, 1
          %s665 = scalar_lea.vmem [#allocation12], %s664
          %667 = vsyncadd %s663, 0
          %s668 = scalar_lea.hbm %s14, %s33
          %s670 = sshll.u32 %s668, 4
          %s671 = int_to_ptr.hbm [resolvable:$true] %s670
          %s672 = sshll.u32 %s665, 4
          %s673 = int_to_ptr.vmem [resolvable:$true] %s672
          %675 = dma.hbm_to_vmem [thread:$0]  %s671, 16, %s673, %s663
        $region84: #{tpu_custom_call.1} parent=39 // pred_fallthru
          _
        // Predicated region
        $region85: #{tpu_custom_call.1} parent=39 // pred_check
          %p676 = pneg %p423
        $region86: #{tpu_custom_call.1} parent=39 // pred_check_branch
          %678 = sbr.rel (%p676) target = $region88
        $region87: #{tpu_custom_call.1} parent=39 // pred_region
          %p679 = scmp.lt.s32.totalorder %s33, 1
          %s680 = scalar_select %p679, %s33, 1
          %s681 = scalar_lea.vmem %s15, %s680
        $region88: #{tpu_custom_call.1} parent=39 // pred_fallthru
          _
      $region40: #{tpu_custom_call.1} parent=5 // pred_fallthru
        _
      %p682 = scmp.le.s32.totalorder 1, %s33
      %p683 = scmp.lt.s32.totalorder %s33, 3
      %p684 = pnand %p682, %p683
      %p685 = pneg %p684
      // Predicated region
      $region89: #{tpu_custom_call.1} parent=5 // pred_check
        _
      $region90: #{tpu_custom_call.1} parent=5 // pred_check_branch
        %687 = sbr.rel (%p684) target = $region92
      $region91: #{tpu_custom_call.1} parent=5 // pred_region
        %s688 = ssub.s32 %s33, 1
        // Predicated region
        $region93: #{tpu_custom_call.1} parent=91 // pred_check
          %p689 = pneg %p54
        $region94: #{tpu_custom_call.1} parent=91 // pred_check_branch
          %691 = sbr.rel (%p689) target = $region96
        $region95: #{tpu_custom_call.1} parent=91 // pred_region
          %693 = dma.done [#allocation4], 256
        $region96: #{tpu_custom_call.1} parent=91 // pred_fallthru
          _
        // Predicated region
        $region97: #{tpu_custom_call.1} parent=91 // pred_check
          %p694 = pneg %p75
        $region98: #{tpu_custom_call.1} parent=91 // pred_check_branch
          %696 = sbr.rel (%p694) target = $region100
        $region99: #{tpu_custom_call.1} parent=91 // pred_region
          %698 = dma.done [#allocation7], 16
        $region100: #{tpu_custom_call.1} parent=91 // pred_fallthru
          _
        // Predicated region
        $region101: #{tpu_custom_call.1} parent=91 // pred_check
          %p699 = pneg %p96
        $region102: #{tpu_custom_call.1} parent=91 // pred_check_branch
          %701 = sbr.rel (%p699) target = $region104
        $region103: #{tpu_custom_call.1} parent=91 // pred_region
          %703 = dma.done [#allocation7], 16
        $region104: #{tpu_custom_call.1} parent=91 // pred_fallthru
          _
        %s704 = sand.u32 %s38, 1
        %s705 = scalar_lea.sflag [#allocation10], %s704
        %s706 = sand.u32 %s156, 1
        %s707 = scalar_lea.vmem [#allocation9], %s706
        // Predicated region
        $region105: #{tpu_custom_call.1} parent=91 // pred_check
          %p708 = pneg %p169
        $region106: #{tpu_custom_call.1} parent=91 // pred_check_branch
          %710 = sbr.rel (%p708) target = $region108
        $region107: #{tpu_custom_call.1} parent=91 // pred_region
          %712 = dma.done %s705, 16
        $region108: #{tpu_custom_call.1} parent=91 // pred_fallthru
          _
        %s713 = sand.u32 %s38, 1
        %s714 = scalar_lea.sflag [#allocation10], %s713
        %s715 = sand.u32 %s234, 1
        %s716 = scalar_lea.vmem [#allocation11], %s715
        // Predicated region
        $region109: #{tpu_custom_call.1} parent=91 // pred_check
          %p717 = pneg %p247
        $region110: #{tpu_custom_call.1} parent=91 // pred_check_branch
          %719 = sbr.rel (%p717) target = $region112
        $region111: #{tpu_custom_call.1} parent=91 // pred_region
          %721 = dma.done %s714, 16
        $region112: #{tpu_custom_call.1} parent=91 // pred_fallthru
          _
        %s722 = sand.u32 %s38, 1
        %s723 = scalar_lea.sflag [#allocation13], %s722
        %s724 = sand.u32 %s390, 1
        %s725 = scalar_lea.vmem [#allocation12], %s724
        // Predicated region
        $region113: #{tpu_custom_call.1} parent=91 // pred_check
          %p726 = pneg %p403
        $region114: #{tpu_custom_call.1} parent=91 // pred_check_branch
          %728 = sbr.rel (%p726) target = $region116
        $region115: #{tpu_custom_call.1} parent=91 // pred_region
          %730 = dma.done %s723, 16
        $region116: #{tpu_custom_call.1} parent=91 // pred_fallthru
          _
        // Predicated region
        $region117: #{tpu_custom_call.1} parent=91 // pred_check
          %p731 = pneg %p450
        $region118: #{tpu_custom_call.1} parent=91 // pred_check_branch
          %733 = sbr.rel (%p731) target = $region120
        $region119: #{tpu_custom_call.1} parent=91 // pred_region
          %735 = dma.done [#allocation13], 512
        $region120: #{tpu_custom_call.1} parent=91 // pred_fallthru
          _
        %p736 = pneg %p54
        %p737 = pneg %p51
        %p738 = pneg %p75
        %p739 = pneg %p72
        %p740 = pneg %p96
        %p741 = pneg %p93
        %p742 = pneg %p117
        %p743 = pneg %p114
        %p744 = scmp.lt.s32.totalorder %s38, 1
        %s745 = scalar_select %p744, %s38, 1
        %s746 = smul.addr %s745, 4
        %s747 = smul.addr %s746, 8
        %s748 = scalar_lea.vmem %s4, %s747
        %p749 = pneg %p143
        %p750 = pneg %p140
        %s751 = sand.u32 %s38, 1
        %s752 = scalar_lea.sflag [#allocation10], %s751
        %s753 = sand.u32 %s156, 1
        %s754 = scalar_lea.vmem [#allocation9], %s753
        %p755 = pneg %p169
        %p756 = pneg %p166
        %p757 = scmp.lt.s32.totalorder %s38, 1
        %s758 = scalar_select %p757, %s38, 1
        %s759 = smul.addr %s758, 4
        %s760 = smul.addr %s759, 8
        %s761 = scalar_lea.vmem %s6, %s760
        %p762 = pneg %p195
        %p763 = pneg %p192
        %p764 = scmp.lt.s32.totalorder %s38, 1
        %s765 = scalar_select %p764, %s38, 1
        %s766 = scalar_lea.vmem %s7, %s765
        %p767 = pneg %p221
        %p768 = pneg %p218
        %s769 = sand.u32 %s38, 1
        %s770 = scalar_lea.sflag [#allocation10], %s769
        %s771 = sand.u32 %s234, 1
        %s772 = scalar_lea.vmem [#allocation11], %s771
        %p773 = pneg %p247
        %p774 = pneg %p244
        %p775 = scmp.lt.s32.totalorder %s38, 1
        %s776 = scalar_select %p775, %s38, 1
        %s777 = scalar_lea.vmem %s9, %s776
        %p778 = pneg %p273
        %p779 = pneg %p270
        %p780 = scmp.lt.s32.totalorder %s38, 1
        %s781 = scalar_select %p780, %s38, 1
        %s782 = smul.addr %s781, 4
        %s783 = smul.addr %s782, 8
        %s784 = scalar_lea.vmem %s10, %s783
        %p785 = pneg %p299
        %p786 = pneg %p296
        %p787 = scmp.lt.s32.totalorder %s38, 1
        %s788 = scalar_select %p787, %s38, 1
        %s789 = scalar_lea.vmem %s11, %s788
        %p790 = pneg %p325
        %p791 = pneg %p322
        %p792 = scmp.lt.s32.totalorder %s38, 1
        %s793 = scalar_select %p792, %s38, 1
        %s794 = smul.addr %s793, 8
        %s795 = smul.addr %s794, 8
        %s796 = scalar_lea.vmem %s12, %s795
        %p797 = pneg %p351
        %p798 = pneg %p348
        %p799 = scmp.lt.s32.totalorder %s38, 1
        %s800 = scalar_select %p799, %s38, 1
        %s801 = scalar_lea.vmem %s13, %s800
        %p802 = pneg %p377
        %p803 = pneg %p374
        %s804 = sand.u32 %s38, 1
        %s805 = scalar_lea.sflag [#allocation13], %s804
        %s806 = sand.u32 %s390, 1
        %s807 = scalar_lea.vmem [#allocation12], %s806
        %p808 = pneg %p403
        %p809 = pneg %p400
        %p810 = scmp.lt.s32.totalorder %s38, 1
        %s811 = scalar_select %p810, %s38, 1
        %s812 = scalar_lea.vmem %s15, %s811
        %p813 = pneg %p429
        %p814 = pneg %p426
        %p815 = pneg %p450
        %p816 = pneg %p447
        %p817 = pneg %p471
        %p818 = pneg %p468
        %p819 = pneg %p492
        %p820 = pneg %p489
        %p821 = scmp.lt.s32.totalorder %s38, 1
        %s822 = scalar_select %p821, %s38, 1
        %s823 = smul.addr %s822, 4
        %s824 = smul.addr %s823, 8
        %s825 = scalar_lea.vmem %s4, %s824
        %p826 = scmp.lt.s32.totalorder %s38, 1
        %s827 = scalar_select %p826, %s38, 1
        %s828 = smul.addr %s827, 4
        %s829 = smul.addr %s828, 8
        %s830 = scalar_lea.vmem %s6, %s829
        %p831 = scmp.lt.s32.totalorder %s38, 1
        %s832 = scalar_select %p831, %s38, 1
        %s833 = scalar_lea.vmem %s7, %s832
        %p834 = scmp.lt.s32.totalorder %s38, 1
        %s835 = scalar_select %p834, %s38, 1
        %s836 = scalar_lea.vmem %s9, %s835
        %p837 = scmp.lt.s32.totalorder %s38, 1
        %s838 = scalar_select %p837, %s38, 1
        %s839 = smul.addr %s838, 4
        %s840 = smul.addr %s839, 8
        %s841 = scalar_lea.vmem %s10, %s840
        %p842 = scmp.lt.s32.totalorder %s38, 1
        %s843 = scalar_select %p842, %s38, 1
        %s844 = scalar_lea.vmem %s11, %s843
        %p845 = scmp.lt.s32.totalorder %s38, 1
        %s846 = scalar_select %p845, %s38, 1
        %s847 = smul.addr %s846, 8
        %s848 = smul.addr %s847, 8
        %s849 = scalar_lea.vmem %s12, %s848
        %p850 = scmp.lt.s32.totalorder %s38, 1
        %s851 = scalar_select %p850, %s38, 1
        %s852 = scalar_lea.vmem %s13, %s851
        %p853 = scmp.lt.s32.totalorder %s38, 1
        %s854 = scalar_select %p853, %s38, 1
        %s855 = scalar_lea.vmem %s15, %s854
        %p856 = scmp.eq.s32.totalorder %s38, 0
        // Predicated region
        $region121: #{tpu_custom_call.1} parent=91 // pred_check
          %p857 = pneg %p856
        $region122: #{tpu_custom_call.1} parent=91 // pred_check_branch
          %859 = sbr.rel (%p857) target = $region124
        $region123: #{tpu_custom_call.1} parent=91 // pred_region
          %v860 = vld [vmem:[#allocation3] sm:$0xff]
          %v861 = vld [vmem:[#allocation3 + $0x8] sm:$0xff]
          %v862 = vld [vmem:[#allocation6] sm:$0x1]
          %v863 = vld [vmem:[#allocation8] sm:$0x1]
          %vm864 = vcmask 261120
          %v865 = vsel %vm864, %v860, 0.0
          %866 = vadd.xlane.f32.xlu0 %v865
          %v867 = vpop.xlane.xlu0 %866
          %v868 = vsel %vm864, %v861, 0.0
          %869 = vadd.xlane.f32.xlu0 %v868
          %v870 = vpop.xlane.xlu0 %869
          %v871 = vrcp.pop 32.0
          %v872 = vmul.f32 32.0, %v871
          %v873 = vsub.f32 1.0, %v872
          %v874 = vmul.f32 %v871, %v873
          %v875 = vadd.f32 %v871, %v874
          %vm876 = vweird.f32 %v871
          %v877 = vsel %vm876, %v871, %v875
          %v878 = vmul.f32 %v867, %v877
          %v879 = vmul.f32 %v870, %v877
          %v880 = vsub.f32 %v860, %v878
          %v881 = vsub.f32 %v861, %v879
          %v882 = vmul.f32 %v880, %v880
          %v883 = vmul.f32 %v881, %v881
          %v884 = vsel %vm864, %v882, 0.0
          %885 = vadd.xlane.f32.xlu0 %v884
          %v886 = vpop.xlane.xlu0 %885
          %v887 = vsel %vm864, %v883, 0.0
          %888 = vadd.xlane.f32.xlu0 %v887
          %v889 = vpop.xlane.xlu0 %888
          %v890 = vmul.f32 %v886, %v877
          %v891 = vmul.f32 %v889, %v877
          %v892 = vadd.f32 %v890, 1e-12
          %v893 = vadd.f32 %v891, 1e-12
          %v894 = vrsqrt.pop %v892
          %v895 = vmul.f32 %v894, %v892
          %v896 = vmul.f32 %v895, %v894
          %v897 = vmul.f32 0.5, %v896
          %v898 = vsub.f32 1.5, %v897
          %v899 = vmul.f32 %v894, %v898
          %vm900 = vweird.f32 %v892
          %vm901 = vweird.f32 %v894
          %vm902 = vmor %vm900, %vm901
          %v903 = vsel %vm902, %v894, %v899
          %v904 = vrsqrt.pop %v893
          %v905 = vmul.f32 %v904, %v893
          %v906 = vmul.f32 %v905, %v904
          %v907 = vmul.f32 0.5, %v906
          %v908 = vsub.f32 1.5, %v907
          %v909 = vmul.f32 %v904, %v908
          %vm910 = vweird.f32 %v893
          %vm911 = vweird.f32 %v904
          %vm912 = vmor %vm910, %vm911
          %v913 = vsel %vm912, %v904, %v909
          %v914 = vmul.f32 %v880, %v903
          %v915 = vmul.f32 %v881, %v913
          %v917 = vperm.slane %v862, 0
          %v919 = vmul.f32 %v914, %v917
          %v920 = vmul.f32 %v915, %v917
          %v922 = vperm.slane %v863, 0
          %v924 = vadd.f32 %v919, %v922
          %v925 = vadd.f32 %v920, %v922
          %926 = vst.msk [vmem:[#allocation2] sm:$0xff] %vm864, %v924
          %927 = vst.msk [vmem:[#allocation2 + $0x8] sm:$0xff] %vm864, %v925
        $region124: #{tpu_custom_call.1} parent=91 // pred_fallthru
          _
        %v928 = vld [vmem:[#allocation2] sm:$0xff]
        %v929 = vld [vmem:[#allocation2 + $0x8] sm:$0xff]
        %v930 = vld [vmem:[%s825] sm:$0xff]
        %v931 = vld [vmem:[%s825 + $0x8] sm:$0xff]
        %v932 = vld [vmem:[%s825 + $0x10] sm:$0xff]
        %v933 = vld [vmem:[%s825 + $0x18] sm:$0xff]
        %v934 = vld [vmem:[%s707] sm:$0x1]
        %v936 = vperm.slane %v934, 0
        %vm938 = vcmask 261120
        %v940 = vsel %vm938, %v928, 0
        %v943 = vsel %vm938, %v929, 0
        %945 = vmatpush.msra.mxu0 0.0
        %946 = vmatpush.msra.mxu0 0.0
        %947 = vmatpush.msra.mxu0 0.0
        %948 = vmatpush.msra.mxu0 0.0
        %949 = vmatpush.msra.mxu0 0.0
        %950 = vmatpush.msra.mxu0 0.0
        %951 = vmatpush.msra.mxu0 0.0
        %952 = vmatpush.msra.mxu0 0.0
        %953 = vmatpush.msra.mxu0 0.0
        %954 = vmatpush.msra.mxu0 0.0
        %955 = vmatpush.msra.mxu0 0.0
        %956 = vmatpush.msra.mxu0 0.0
        %957 = vmatpush.msra.mxu0 %v933
        %958 = vmatpush.msra.mxu0 %v932
        %959 = vmatpush.msra.mxu0 %v931
        %960 = vmatpush.msra.mxu0 %v930
        %961 = vmatmul.f32.gmra.mxu0 %v940
        %v962 = vpop.f32.mrf.mxu0
        %v963 = vadd.f32 %v936, %v962
        %964 = vmatmul.f32.gmra.mxu0 %v943
        %v965 = vpop.f32.mrf.mxu0
        %v966 = vadd.f32 %v936, %v965
        %967 = vdwg.mxu0
        %v968 = vld [vmem:[%s3] sm:$0x1]
        %v969 = vld [vmem:[%s3 + $0x1] sm:$0x1]
        %971 = vrot.lane.b32.xlu0 %v963, 96
        %v972 = vpop.permute.xlu0 %971
        %vm973 = vcmask 130048
        %v974 = vsel %vm973, %v963, 0
        %v976 = vsel %vm973, %v972, 0
        %978 = vmatpush.xpose.msra.mxu0 0.0
        %979 = vmatpush.xpose.msra.mxu0 0.0
        %980 = vmatpush.xpose.msra.mxu0 0.0
        %981 = vmatpush.xpose.msra.mxu0 0.0
        %982 = vmatpush.xpose.msra.mxu0 0.0
        %983 = vmatpush.xpose.msra.mxu0 0.0
        %984 = vmatpush.xpose.msra.mxu0 0.0
        %985 = vmatpush.xpose.msra.mxu0 0.0
        %986 = vmatpush.xpose.msra.mxu0 0.0
        %987 = vmatpush.xpose.msra.mxu0 0.0
        %988 = vmatpush.xpose.msra.mxu0 0.0
        %989 = vmatpush.xpose.msra.mxu0 0.0
        %990 = vmatpush.xpose.msra.mxu0 0.0
        %991 = vmatpush.xpose.msra.mxu0 0.0
        %992 = vmatpush.xpose.msra.mxu0 0.0
        %993 = vmatpush.xpose.msra.mxu0 %v976
        %994 = vmatmul.f32.gmra.mxu0 %v974
        %v995 = vpop.f32.mrf.mxu0
        %v996 = vadd.f32 0.0, %v995
        %997 = vdwg.mxu0
        %999 = vrot.lane.b32.xlu0 %v966, 96
        %v1000 = vpop.permute.xlu0 %999
        %v1001 = vsel %vm973, %v966, 0
        %v1003 = vsel %vm973, %v1000, 0
        %1005 = vmatpush.xpose.msra.mxu0 0.0
        %1006 = vmatpush.xpose.msra.mxu0 0.0
        %1007 = vmatpush.xpose.msra.mxu0 0.0
        %1008 = vmatpush.xpose.msra.mxu0 0.0
        %1009 = vmatpush.xpose.msra.mxu0 0.0
        %1010 = vmatpush.xpose.msra.mxu0 0.0
        %1011 = vmatpush.xpose.msra.mxu0 0.0
        %1012 = vmatpush.xpose.msra.mxu0 0.0
        %1013 = vmatpush.xpose.msra.mxu0 0.0
        %1014 = vmatpush.xpose.msra.mxu0 0.0
        %1015 = vmatpush.xpose.msra.mxu0 0.0
        %1016 = vmatpush.xpose.msra.mxu0 0.0
        %1017 = vmatpush.xpose.msra.mxu0 0.0
        %1018 = vmatpush.xpose.msra.mxu0 0.0
        %1019 = vmatpush.xpose.msra.mxu0 0.0
        %1020 = vmatpush.xpose.msra.mxu0 %v1003
        %1021 = vmatmul.f32.gmra.mxu0 %v1001
        %v1022 = vpop.f32.mrf.mxu0
        %v1023 = vadd.f32 0.0, %v1022
        %1024 = vdwg.mxu0
        %v1025 = vmul.f32 %v996, 0.25
        %v1026 = vmul.f32 %v1023, 0.25
        %v1029 = vperm.slane %v968, 0
        %v1030 = vperm.slane %v969, 0
        %v1033 = vadd.f32 %v1025, %v1029
        %v1034 = vadd.f32 %v1026, %v1030
        %vm1035 = vcmask 64512
        %v1036 = vsel %vm1035, %v1033, -inf
        %1037 = vmax.xlane.f32.xlu0 %v1036
        %v1038 = vpop.xlane.xlu0 %1037
        %v1039 = vsel %vm1035, %v1034, -inf
        %1040 = vmax.xlane.f32.xlu0 %v1039
        %v1041 = vpop.xlane.xlu0 %1040
        %v1042 = vsub.f32 %v1033, %v1038
        %v1043 = vsub.f32 %v1034, %v1041
        %v1044 = vmul.f32 %v1042, 1.442695
        %v1045 = vpow.pop %v1044
        %v1046 = vmul.f32 %v1043, 1.442695
        %v1047 = vpow.pop %v1046
        %v1048 = vsel %vm1035, %v1045, 0.0
        %1049 = vadd.xlane.f32.xlu0 %v1048
        %v1050 = vpop.xlane.xlu0 %1049
        %v1051 = vsel %vm1035, %v1047, 0.0
        %1052 = vadd.xlane.f32.xlu0 %v1051
        %v1053 = vpop.xlane.xlu0 %1052
        %v1054 = vrcp.pop %v1050
        %v1055 = vrcp.pop %v1053
        %v1056 = vmul.f32 %v1045, %v1054
        %v1057 = vmul.f32 %v1047, %v1055
        %1058 = vrot.lane.b32.xlu0 %v963, 64
        %v1059 = vpop.permute.xlu0 %1058
        %v1062 = vsel %vm1035, %v1056, 0
        %1064 = vmatpush.msra.mxu0 0.0
        %1065 = vmatpush.msra.mxu0 0.0
        %1066 = vmatpush.msra.mxu0 0.0
        %1067 = vmatpush.msra.mxu0 0.0
        %1068 = vmatpush.msra.mxu0 0.0
        %1069 = vmatpush.msra.mxu0 0.0
        %1070 = vmatpush.msra.mxu0 0.0
        %1071 = vmatpush.msra.mxu0 0.0
        %1072 = vmatpush.msra.mxu0 0.0
        %1073 = vmatpush.msra.mxu0 0.0
        %1074 = vmatpush.msra.mxu0 0.0
        %1075 = vmatpush.msra.mxu0 0.0
        %1076 = vmatpush.msra.mxu0 0.0
        %1077 = vmatpush.msra.mxu0 0.0
        %1078 = vmatpush.msra.mxu0 0.0
        %1079 = vmatpush.msra.mxu0 %v1059
        %1080 = vmatmul.f32.gmra.mxu0 %v1062
        %v1081 = vpop.f32.mrf.mxu0
        %v1082 = vadd.f32 0.0, %v1081
        %1083 = vdwg.mxu0
        %1084 = vrot.lane.b32.xlu0 %v966, 64
        %v1085 = vpop.permute.xlu0 %1084
        %v1088 = vsel %vm1035, %v1057, 0
        %1090 = vmatpush.msra.mxu0 0.0
        %1091 = vmatpush.msra.mxu0 0.0
        %1092 = vmatpush.msra.mxu0 0.0
        %1093 = vmatpush.msra.mxu0 0.0
        %1094 = vmatpush.msra.mxu0 0.0
        %1095 = vmatpush.msra.mxu0 0.0
        %1096 = vmatpush.msra.mxu0 0.0
        %1097 = vmatpush.msra.mxu0 0.0
        %1098 = vmatpush.msra.mxu0 0.0
        %1099 = vmatpush.msra.mxu0 0.0
        %1100 = vmatpush.msra.mxu0 0.0
        %1101 = vmatpush.msra.mxu0 0.0
        %1102 = vmatpush.msra.mxu0 0.0
        %1103 = vmatpush.msra.mxu0 0.0
        %1104 = vmatpush.msra.mxu0 0.0
        %1105 = vmatpush.msra.mxu0 %v1085
        %1106 = vmatmul.f32.gmra.mxu0 %v1088
        %v1107 = vpop.f32.mrf.mxu0
        %v1108 = vadd.f32 0.0, %v1107
        %1109 = vdwg.mxu0
        %1110 = vrot.lane.b32.xlu0 %v963, 112
        %v1111 = vpop.permute.xlu0 %1110
        %1112 = vrot.lane.b32.xlu0 %v963, 80
        %v1113 = vpop.permute.xlu0 %1112
        %v1114 = vsel %vm973, %v1111, 0
        %v1116 = vsel %vm973, %v1113, 0
        %1118 = vmatpush.xpose.msra.mxu0 0.0
        %1119 = vmatpush.xpose.msra.mxu0 0.0
        %1120 = vmatpush.xpose.msra.mxu0 0.0
        %1121 = vmatpush.xpose.msra.mxu0 0.0
        %1122 = vmatpush.xpose.msra.mxu0 0.0
        %1123 = vmatpush.xpose.msra.mxu0 0.0
        %1124 = vmatpush.xpose.msra.mxu0 0.0
        %1125 = vmatpush.xpose.msra.mxu0 0.0
        %1126 = vmatpush.xpose.msra.mxu0 0.0
        %1127 = vmatpush.xpose.msra.mxu0 0.0
        %1128 = vmatpush.xpose.msra.mxu0 0.0
        %1129 = vmatpush.xpose.msra.mxu0 0.0
        %1130 = vmatpush.xpose.msra.mxu0 0.0
        %1131 = vmatpush.xpose.msra.mxu0 0.0
        %1132 = vmatpush.xpose.msra.mxu0 0.0
        %1133 = vmatpush.xpose.msra.mxu0 %v1116
        %1134 = vmatmul.f32.gmra.mxu0 %v1114
        %v1135 = vpop.f32.mrf.mxu0
        %v1136 = vadd.f32 0.0, %v1135
        %1137 = vdwg.mxu0
        %1138 = vrot.lane.b32.xlu0 %v966, 112
        %v1139 = vpop.permute.xlu0 %1138
        %1140 = vrot.lane.b32.xlu0 %v966, 80
        %v1141 = vpop.permute.xlu0 %1140
        %v1142 = vsel %vm973, %v1139, 0
        %v1144 = vsel %vm973, %v1141, 0
        %1146 = vmatpush.xpose.msra.mxu0 0.0
        %1147 = vmatpush.xpose.msra.mxu0 0.0
        %1148 = vmatpush.xpose.msra.mxu0 0.0
        %1149 = vmatpush.xpose.msra.mxu0 0.0
        %1150 = vmatpush.xpose.msra.mxu0 0.0
        %1151 = vmatpush.xpose.msra.mxu0 0.0
        %1152 = vmatpush.xpose.msra.mxu0 0.0
        %1153 = vmatpush.xpose.msra.mxu0 0.0
        %1154 = vmatpush.xpose.msra.mxu0 0.0
        %1155 = vmatpush.xpose.msra.mxu0 0.0
        %1156 = vmatpush.xpose.msra.mxu0 0.0
        %1157 = vmatpush.xpose.msra.mxu0 0.0
        %1158 = vmatpush.xpose.msra.mxu0 0.0
        %1159 = vmatpush.xpose.msra.mxu0 0.0
        %1160 = vmatpush.xpose.msra.mxu0 0.0
        %1161 = vmatpush.xpose.msra.mxu0 %v1144
        %1162 = vmatmul.f32.gmra.mxu0 %v1142
        %v1163 = vpop.f32.mrf.mxu0
        %v1164 = vadd.f32 0.0, %v1163
        %1165 = vdwg.mxu0
        %v1166 = vmul.f32 %v1136, 0.25
        %v1167 = vmul.f32 %v1164, 0.25
        %v1168 = vadd.f32 %v1166, %v1029
        %v1169 = vadd.f32 %v1167, %v1030
        %v1170 = vsel %vm1035, %v1168, -inf
        %1171 = vmax.xlane.f32.xlu0 %v1170
        %v1172 = vpop.xlane.xlu0 %1171
        %v1173 = vsel %vm1035, %v1169, -inf
        %1174 = vmax.xlane.f32.xlu0 %v1173
        %v1175 = vpop.xlane.xlu0 %1174
        %v1176 = vsub.f32 %v1168, %v1172
        %v1177 = vsub.f32 %v1169, %v1175
        %v1178 = vmul.f32 %v1176, 1.442695
        %v1179 = vpow.pop %v1178
        %v1180 = vmul.f32 %v1177, 1.442695
        %v1181 = vpow.pop %v1180
        %v1182 = vsel %vm1035, %v1179, 0.0
        %1183 = vadd.xlane.f32.xlu0 %v1182
        %v1184 = vpop.xlane.xlu0 %1183
        %v1185 = vsel %vm1035, %v1181, 0.0
        %1186 = vadd.xlane.f32.xlu0 %v1185
        %v1187 = vpop.xlane.xlu0 %1186
        %v1188 = vrcp.pop %v1184
        %v1189 = vrcp.pop %v1187
        %v1190 = vmul.f32 %v1179, %v1188
        %v1191 = vmul.f32 %v1181, %v1189
        %1192 = vrot.lane.b32.xlu0 %v963, 48
        %v1193 = vpop.permute.xlu0 %1192
        %v1196 = vsel %vm1035, %v1190, 0
        %1198 = vmatpush.msra.mxu0 0.0
        %1199 = vmatpush.msra.mxu0 0.0
        %1200 = vmatpush.msra.mxu0 0.0
        %1201 = vmatpush.msra.mxu0 0.0
        %1202 = vmatpush.msra.mxu0 0.0
        %1203 = vmatpush.msra.mxu0 0.0
        %1204 = vmatpush.msra.mxu0 0.0
        %1205 = vmatpush.msra.mxu0 0.0
        %1206 = vmatpush.msra.mxu0 0.0
        %1207 = vmatpush.msra.mxu0 0.0
        %1208 = vmatpush.msra.mxu0 0.0
        %1209 = vmatpush.msra.mxu0 0.0
        %1210 = vmatpush.msra.mxu0 0.0
        %1211 = vmatpush.msra.mxu0 0.0
        %1212 = vmatpush.msra.mxu0 0.0
        %1213 = vmatpush.msra.mxu0 %v1193
        %1214 = vmatmul.f32.gmra.mxu0 %v1196
        %v1215 = vpop.f32.mrf.mxu0
        %v1216 = vadd.f32 0.0, %v1215
        %1217 = vdwg.mxu0
        %1218 = vrot.lane.b32.xlu0 %v966, 48
        %v1219 = vpop.permute.xlu0 %1218
        %v1222 = vsel %vm1035, %v1191, 0
        %1224 = vmatpush.msra.mxu0 0.0
        %1225 = vmatpush.msra.mxu0 0.0
        %1226 = vmatpush.msra.mxu0 0.0
        %1227 = vmatpush.msra.mxu0 0.0
        %1228 = vmatpush.msra.mxu0 0.0
        %1229 = vmatpush.msra.mxu0 0.0
        %1230 = vmatpush.msra.mxu0 0.0
        %1231 = vmatpush.msra.mxu0 0.0
        %1232 = vmatpush.msra.mxu0 0.0
        %1233 = vmatpush.msra.mxu0 0.0
        %1234 = vmatpush.msra.mxu0 0.0
        %1235 = vmatpush.msra.mxu0 0.0
        %1236 = vmatpush.msra.mxu0 0.0
        %1237 = vmatpush.msra.mxu0 0.0
        %1238 = vmatpush.msra.mxu0 0.0
        %1239 = vmatpush.msra.mxu0 %v1219
        %1240 = vmatmul.f32.gmra.mxu0 %v1222
        %v1241 = vpop.f32.mrf.mxu0
        %v1242 = vadd.f32 0.0, %v1241
        %1243 = vdwg.mxu0
        %1246 = vrot.lane.b32.xlu0 %v1216, 16
        %v1247 = vpop.permute.xlu0 %1246
        %1248 = vrot.lane.b32.xlu0 %v1242, 16
        %v1249 = vpop.permute.xlu0 %1248
        %v1252 = vsel %vm973, %v1082, %v1247
        %v1253 = vsel %vm973, %v1108, %v1249
        %v1254 = vld [vmem:[%s830] sm:$0xff]
        %v1255 = vld [vmem:[%s830 + $0x8] sm:$0xff]
        %v1256 = vld [vmem:[%s830 + $0x10] sm:$0xff]
        %v1257 = vld [vmem:[%s830 + $0x18] sm:$0xff]
        %v1258 = vld [vmem:[%s833] sm:$0x1]
        %v1260 = vperm.slane %v1258, 0
        %v1263 = vsel %vm938, %v1252, 0
        %v1266 = vsel %vm938, %v1253, 0
        %1268 = vmatpush.msra.mxu0 0.0
        %1269 = vmatpush.msra.mxu0 0.0
        %1270 = vmatpush.msra.mxu0 0.0
        %1271 = vmatpush.msra.mxu0 0.0
        %1272 = vmatpush.msra.mxu0 0.0
        %1273 = vmatpush.msra.mxu0 0.0
        %1274 = vmatpush.msra.mxu0 0.0
        %1275 = vmatpush.msra.mxu0 0.0
        %1276 = vmatpush.msra.mxu0 0.0
        %1277 = vmatpush.msra.mxu0 0.0
        %1278 = vmatpush.msra.mxu0 0.0
        %1279 = vmatpush.msra.mxu0 0.0
        %1280 = vmatpush.msra.mxu0 %v1257
        %1281 = vmatpush.msra.mxu0 %v1256
        %1282 = vmatpush.msra.mxu0 %v1255
        %1283 = vmatpush.msra.mxu0 %v1254
        %1284 = vmatmul.f32.gmra.mxu0 %v1263
        %v1285 = vpop.f32.mrf.mxu0
        %v1286 = vadd.f32 %v1260, %v1285
        %1287 = vmatmul.f32.gmra.mxu0 %v1266
        %v1288 = vpop.f32.mrf.mxu0
        %v1289 = vadd.f32 %v1260, %v1288
        %1290 = vdwg.mxu0
        %v1291 = vadd.f32 %v928, %v1286
        %v1292 = vadd.f32 %v929, %v1289
        %v1293 = vld [vmem:[%s716] sm:$0x1]
        %v1294 = vld [vmem:[%s836] sm:$0x1]
        %v1295 = vsel %vm938, %v1291, 0.0
        %1296 = vadd.xlane.f32.xlu0 %v1295
        %v1297 = vpop.xlane.xlu0 %1296
        %v1298 = vsel %vm938, %v1292, 0.0
        %1299 = vadd.xlane.f32.xlu0 %v1298
        %v1300 = vpop.xlane.xlu0 %1299
        %v1301 = vrcp.pop 32.0
        %v1302 = vmul.f32 32.0, %v1301
        %v1303 = vsub.f32 1.0, %v1302
        %v1304 = vmul.f32 %v1301, %v1303
        %v1305 = vadd.f32 %v1301, %v1304
        %vm1306 = vweird.f32 %v1301
        %v1307 = vsel %vm1306, %v1301, %v1305
        %v1308 = vmul.f32 %v1297, %v1307
        %v1309 = vmul.f32 %v1300, %v1307
        %v1310 = vsub.f32 %v1291, %v1308
        %v1311 = vsub.f32 %v1292, %v1309
        %v1312 = vmul.f32 %v1310, %v1310
        %v1313 = vmul.f32 %v1311, %v1311
        %v1314 = vsel %vm938, %v1312, 0.0
        %1315 = vadd.xlane.f32.xlu0 %v1314
        %v1316 = vpop.xlane.xlu0 %1315
        %v1317 = vsel %vm938, %v1313, 0.0
        %1318 = vadd.xlane.f32.xlu0 %v1317
        %v1319 = vpop.xlane.xlu0 %1318
        %v1320 = vmul.f32 %v1316, %v1307
        %v1321 = vmul.f32 %v1319, %v1307
        %v1322 = vadd.f32 %v1320, 1e-12
        %v1323 = vadd.f32 %v1321, 1e-12
        %v1324 = vrsqrt.pop %v1322
        %v1325 = vmul.f32 %v1324, %v1322
        %v1326 = vmul.f32 %v1325, %v1324
        %v1327 = vmul.f32 0.5, %v1326
        %v1328 = vsub.f32 1.5, %v1327
        %v1329 = vmul.f32 %v1324, %v1328
        %vm1330 = vweird.f32 %v1322
        %vm1331 = vweird.f32 %v1324
        %vm1332 = vmor %vm1330, %vm1331
        %v1333 = vsel %vm1332, %v1324, %v1329
        %v1334 = vrsqrt.pop %v1323
        %v1335 = vmul.f32 %v1334, %v1323
        %v1336 = vmul.f32 %v1335, %v1334
        %v1337 = vmul.f32 0.5, %v1336
        %v1338 = vsub.f32 1.5, %v1337
        %v1339 = vmul.f32 %v1334, %v1338
        %vm1340 = vweird.f32 %v1323
        %vm1341 = vweird.f32 %v1334
        %vm1342 = vmor %vm1340, %vm1341
        %v1343 = vsel %vm1342, %v1334, %v1339
        %v1344 = vmul.f32 %v1310, %v1333
        %v1345 = vmul.f32 %v1311, %v1343
        %v1347 = vperm.slane %v1293, 0
        %v1349 = vmul.f32 %v1344, %v1347
        %v1350 = vmul.f32 %v1345, %v1347
        %v1352 = vperm.slane %v1294, 0
        %v1354 = vadd.f32 %v1349, %v1352
        %v1355 = vadd.f32 %v1350, %v1352
        %v1356 = vld [vmem:[%s841] sm:$0xff]
        %v1357 = vld [vmem:[%s841 + $0x8] sm:$0xff]
        %v1358 = vld [vmem:[%s841 + $0x10] sm:$0xff]
        %v1359 = vld [vmem:[%s841 + $0x18] sm:$0xff]
        %v1360 = vld [vmem:[%s844] sm:$0x1]
        %v1362 = vperm.slane %v1360, 0
        %v1365 = vsel %vm938, %v1354, 0
        %v1368 = vsel %vm938, %v1355, 0
        %1370 = vmatpush.msra.mxu0 0.0
        %1371 = vmatpush.msra.mxu0 0.0
        %1372 = vmatpush.msra.mxu0 0.0
        %1373 = vmatpush.msra.mxu0 0.0
        %1374 = vmatpush.msra.mxu0 0.0
        %1375 = vmatpush.msra.mxu0 0.0
        %1376 = vmatpush.msra.mxu0 0.0
        %1377 = vmatpush.msra.mxu0 0.0
        %1378 = vmatpush.msra.mxu0 0.0
        %1379 = vmatpush.msra.mxu0 0.0
        %1380 = vmatpush.msra.mxu0 0.0
        %1381 = vmatpush.msra.mxu0 0.0
        %1382 = vmatpush.msra.mxu0 %v1359
        %1383 = vmatpush.msra.mxu0 %v1358
        %1384 = vmatpush.msra.mxu0 %v1357
        %1385 = vmatpush.msra.mxu0 %v1356
        %1386 = vmatmul.f32.gmra.mxu0 %v1365
        %v1387 = vpop.f32.mrf.mxu0
        %v1388 = vadd.f32 %v1362, %v1387
        %1389 = vmatmul.f32.gmra.mxu0 %v1368
        %v1390 = vpop.f32.mrf.mxu0
        %v1391 = vadd.f32 %v1362, %v1390
        %1392 = vdwg.mxu0
        %v1393 = vmul.f32 %v1388, %v1388
        %v1394 = vmul.f32 %v1391, %v1391
        %v1395 = vmul.f32 %v1388, %v1393
        %v1396 = vmul.f32 %v1391, %v1394
        %v1397 = vmul.f32 %v1395, 0.044715
        %v1398 = vmul.f32 %v1396, 0.044715
        %v1399 = vadd.f32 %v1388, %v1397
        %v1400 = vadd.f32 %v1391, %v1398
        %v1401 = vmul.f32 %v1399, 0.7978846
        %v1402 = vmul.f32 %v1400, 0.7978846
        %v1403 = vtanh.pop %v1401
        %v1404 = vtanh.pop %v1402
        %v1405 = vadd.f32 %v1403, 1.0
        %v1406 = vadd.f32 %v1404, 1.0
        %v1407 = vmul.f32 %v1405, 0.5
        %v1408 = vmul.f32 %v1406, 0.5
        %v1409 = vmul.f32 %v1388, %v1407
        %v1410 = vmul.f32 %v1391, %v1408
        %v1411 = vld [vmem:[%s849] sm:$0xff]
        %v1412 = vld [vmem:[%s849 + $0x8] sm:$0xff]
        %v1413 = vld [vmem:[%s849 + $0x10] sm:$0xff]
        %v1414 = vld [vmem:[%s849 + $0x18] sm:$0xff]
        %v1415 = vld [vmem:[%s849 + $0x20] sm:$0xff]
        %v1416 = vld [vmem:[%s849 + $0x28] sm:$0xff]
        %v1417 = vld [vmem:[%s849 + $0x30] sm:$0xff]
        %v1418 = vld [vmem:[%s849 + $0x38] sm:$0xff]
        %v1419 = vld [vmem:[%s852] sm:$0x1]
        %v1421 = vperm.slane %v1419, 0
        %vm1423 = vcmask 523264
        %v1425 = vsel %vm1423, %v1409, 0
        %v1428 = vsel %vm1423, %v1410, 0
        %1430 = vmatpush.msra.mxu0 0.0
        %1431 = vmatpush.msra.mxu0 0.0
        %1432 = vmatpush.msra.mxu0 0.0
        %1433 = vmatpush.msra.mxu0 0.0
        %1434 = vmatpush.msra.mxu0 0.0
        %1435 = vmatpush.msra.mxu0 0.0
        %1436 = vmatpush.msra.mxu0 0.0
        %1437 = vmatpush.msra.mxu0 0.0
        %1438 = vmatpush.msra.mxu0 %v1418
        %1439 = vmatpush.msra.mxu0 %v1417
        %1440 = vmatpush.msra.mxu0 %v1416
        %1441 = vmatpush.msra.mxu0 %v1415
        %1442 = vmatpush.msra.mxu0 %v1414
        %1443 = vmatpush.msra.mxu0 %v1413
        %1444 = vmatpush.msra.mxu0 %v1412
        %1445 = vmatpush.msra.mxu0 %v1411
        %1446 = vmatmul.f32.gmra.mxu0 %v1425
        %v1447 = vpop.f32.mrf.mxu0
        %v1448 = vadd.f32 %v1421, %v1447
        %1449 = vmatmul.f32.gmra.mxu0 %v1428
        %v1450 = vpop.f32.mrf.mxu0
        %v1451 = vadd.f32 %v1421, %v1450
        %1452 = vdwg.mxu0
        %v1453 = vadd.f32 %v1354, %v1448
        %v1454 = vadd.f32 %v1355, %v1451
        %v1455 = vld [vmem:[%s725] sm:$0x1]
        %v1456 = vld [vmem:[%s855] sm:$0x1]
        %v1457 = vsel %vm938, %v1453, 0.0
        %1458 = vadd.xlane.f32.xlu0 %v1457
        %v1459 = vpop.xlane.xlu0 %1458
        %v1460 = vsel %vm938, %v1454, 0.0
        %1461 = vadd.xlane.f32.xlu0 %v1460
        %v1462 = vpop.xlane.xlu0 %1461
        %v1463 = vmul.f32 %v1459, %v1307
        %v1464 = vmul.f32 %v1462, %v1307
        %v1465 = vsub.f32 %v1453, %v1463
        %v1466 = vsub.f32 %v1454, %v1464
        %v1467 = vmul.f32 %v1465, %v1465
        %v1468 = vmul.f32 %v1466, %v1466
        %v1469 = vsel %vm938, %v1467, 0.0
        %1470 = vadd.xlane.f32.xlu0 %v1469
        %v1471 = vpop.xlane.xlu0 %1470
        %v1472 = vsel %vm938, %v1468, 0.0
        %1473 = vadd.xlane.f32.xlu0 %v1472
        %v1474 = vpop.xlane.xlu0 %1473
        %v1475 = vmul.f32 %v1471, %v1307
        %v1476 = vmul.f32 %v1474, %v1307
        %v1477 = vadd.f32 %v1475, 1e-12
        %v1478 = vadd.f32 %v1476, 1e-12
        %v1479 = vrsqrt.pop %v1477
        %v1480 = vmul.f32 %v1479, %v1477
        %v1481 = vmul.f32 %v1480, %v1479
        %v1482 = vmul.f32 0.5, %v1481
        %v1483 = vsub.f32 1.5, %v1482
        %v1484 = vmul.f32 %v1479, %v1483
        %vm1485 = vweird.f32 %v1477
        %vm1486 = vweird.f32 %v1479
        %vm1487 = vmor %vm1485, %vm1486
        %v1488 = vsel %vm1487, %v1479, %v1484
        %v1489 = vrsqrt.pop %v1478
        %v1490 = vmul.f32 %v1489, %v1478
        %v1491 = vmul.f32 %v1490, %v1489
        %v1492 = vmul.f32 0.5, %v1491
        %v1493 = vsub.f32 1.5, %v1492
        %v1494 = vmul.f32 %v1489, %v1493
        %vm1495 = vweird.f32 %v1478
        %vm1496 = vweird.f32 %v1489
        %vm1497 = vmor %vm1495, %vm1496
        %v1498 = vsel %vm1497, %v1489, %v1494
        %v1499 = vmul.f32 %v1465, %v1488
        %v1500 = vmul.f32 %v1466, %v1498
        %v1502 = vperm.slane %v1455, 0
        %v1504 = vmul.f32 %v1499, %v1502
        %v1505 = vmul.f32 %v1500, %v1502
        %v1507 = vperm.slane %v1456, 0
        %v1509 = vadd.f32 %v1504, %v1507
        %v1510 = vadd.f32 %v1505, %v1507
        %1511 = vst.msk [vmem:[#allocation2] sm:$0xff] %vm938, %v1509
        %1512 = vst.msk [vmem:[#allocation2 + $0x8] sm:$0xff] %vm938, %v1510
        %p1513 = scmp.eq.s32.totalorder %s38, 1
        // Predicated region
        $region125: #{tpu_custom_call.1} parent=91 // pred_check
          %p1514 = pneg %p1513
        $region126: #{tpu_custom_call.1} parent=91 // pred_check_branch
          %1516 = sbr.rel (%p1514) target = $region128
        $region127: #{tpu_custom_call.1} parent=91 // pred_region
          %v1518 = vrot.slane %v1510, 7
          %vm1520 = vcmask 1040384
          %v1521 = vsel %vm1520, %v1509, %v1518
          %v1522 = vld [vmem:[#allocation14] sm:$0xff]
          %v1523 = vld [vmem:[#allocation14 + $0x8] sm:$0xff]
          %v1524 = vld [vmem:[#allocation14 + $0x10] sm:$0xff]
          %v1525 = vld [vmem:[#allocation14 + $0x18] sm:$0xff]
          %v1526 = vld [vmem:[%s17] sm:$0x1]
          %v1528 = vperm.slane %v1526, 0
          %v1531 = vsel %vm938, %v1521, 0
          %1533 = vmatpush.msra.mxu0 0.0
          %1534 = vmatpush.msra.mxu0 0.0
          %1535 = vmatpush.msra.mxu0 0.0
          %1536 = vmatpush.msra.mxu0 0.0
          %1537 = vmatpush.msra.mxu0 0.0
          %1538 = vmatpush.msra.mxu0 0.0
          %1539 = vmatpush.msra.mxu0 0.0
          %1540 = vmatpush.msra.mxu0 0.0
          %1541 = vmatpush.msra.mxu0 0.0
          %1542 = vmatpush.msra.mxu0 0.0
          %1543 = vmatpush.msra.mxu0 0.0
          %1544 = vmatpush.msra.mxu0 0.0
          %1545 = vmatpush.msra.mxu0 %v1525
          %1546 = vmatpush.msra.mxu0 %v1524
          %1547 = vmatpush.msra.mxu0 %v1523
          %1548 = vmatpush.msra.mxu0 %v1522
          %1549 = vmatmul.f32.gmra.mxu0 %v1531
          %v1550 = vpop.f32.mrf.mxu0
          %v1551 = vadd.f32 %v1528, %v1550
          %1552 = vdwg.mxu0
          %v1553 = vtanh.pop %v1551
          %vm1554 = vcmask 254976
          %1555 = vst.msk [vmem:[#allocation15] sm:$0x3] %vm1554, %v1553
        $region128: #{tpu_custom_call.1} parent=91 // pred_fallthru
          _
        // Predicated region
        $region129: #{tpu_custom_call.1} parent=91 // pred_check
          %p1556 = pneg %p489
        $region130: #{tpu_custom_call.1} parent=91 // pred_check_branch
          %1558 = sbr.rel (%p1556) target = $region132
        $region131: #{tpu_custom_call.1} parent=91 // pred_region
          %1560 = vsyncadd [#allocation5], 0
          %s1562 = sshll.u32 [#allocation15], 4
          %s1563 = int_to_ptr.vmem [resolvable:$true] %s1562
          %s1564 = sshll.u32 %s18, 4
          %s1565 = int_to_ptr.hbm [resolvable:$true] %s1564
          %1567 = dma.vmem_to_hbm [thread:$0]  %s1563, 32, %s1565, [#allocation5]
        $region132: #{tpu_custom_call.1} parent=91 // pred_fallthru
          _
        // Predicated region
        $region133: #{tpu_custom_call.1} parent=91 // pred_check
          %p1568 = pneg %p489
        $region134: #{tpu_custom_call.1} parent=91 // pred_check_branch
          %1570 = sbr.rel (%p1568) target = $region136
        $region135: #{tpu_custom_call.1} parent=91 // pred_region
          %1572 = dma.done [#allocation5], 32
        $region136: #{tpu_custom_call.1} parent=91 // pred_fallthru
          _
      $region92: #{tpu_custom_call.1} parent=5 // pred_fallthru
        _
      %p1573 = scmp.le.s32.totalorder 2, %s33
      // Predicated region
      $region137: #{tpu_custom_call.1} parent=5 // pred_check
        %p1574 = pneg %p1573
      $region138: #{tpu_custom_call.1} parent=5 // pred_check_branch
        %1576 = sbr.rel (%p1574) target = $region140
      $region139: #{tpu_custom_call.1} parent=5 // pred_region
        %s1577 = ssub.s32 %s33, 2
      $region140: #{tpu_custom_call.1} parent=5 // pred_fallthru
        _
    $region6: #{tpu_custom_call.1} parent=1 // loop_footer
      %s37 = sadd.s32 1, %s33
    $region7: #{tpu_custom_call.1} parent=1 // loop_footer_branch
      %32 = sbr.rel target = $region3
    $region8: #{tpu_custom_call.1} parent=1 // loop_exit
      _
    %1578 = vsyncpa [#allocation4], 1
    %s1579 = scalar_lea.sflag [#allocation4], 1
    %1580 = vsyncpa %s1579, 1
    %1581 = vsyncpa [#allocation7], 1
    %1582 = vsyncpa [#allocation10], 1
    %s1583 = scalar_lea.sflag [#allocation10], 1
    %1584 = vsyncpa %s1583, 1
    %1585 = vsyncpa [#allocation13], 1
    %s1586 = scalar_lea.sflag [#allocation13], 1
    %1587 = vsyncpa %s1586, 1
    %1588 = vsyncpa [#allocation5], 1
    %s1589 = scalar_lea.sflag [#allocation5], 1
    %1590 = vsyncpa %s1589, 1

</llo_original>
